<compile_context>
chip_gen: v6e
topology: v6e:2x2x1
jax: 0.10.0
libtpu: 0.0.40
codegen_flags: <defaults>
</compile_context>

<pallas_src>
import functools

import jax
import jax.numpy as jnp
from jax import lax
from jax.experimental import pallas as pl
from jax.experimental.pallas import tpu as pltpu

_POS_KEY = 0x7F7FFFFF  # int32 bits of FLT_MAX: larger than any valid packed key


def _pairwise_sq_dists(x2, x1t):
    """cost[j, i] = ||x2[j] - x1[i]||^2 via explicit differences (always >= 0)."""
    d0 = x2[:, 0:1] - x1t[0:1, :]          # (n, 1) - (1, n) -> (n, n)
    c = d0 * d0
    for k in (1, 2):
        dk = x2[:, k:k + 1] - x1t[k:k + 1, :]
        c = c + dk * dk
    return c


def _emd_auction_kernel(x1_ref, x2_ref, dist_ref, assign_ref,
                        key_ref, ainv_ref, *, n, block_b, eps, iters):
    """block_b batch elements: build packed cost keys, run `iters` auction rounds."""
    idx_bits = max(1, (n - 1).bit_length())
    lo_mask = jnp.int32((1 << idx_bits) - 1)
    hi_mask = jnp.int32(~((1 << idx_bits) - 1))

    # Narrow iotas only (never materialize (n, n) index constants).
    row_n1 = lax.broadcasted_iota(jnp.int32, (n, 1), 0)   # item (set-2) index j
    col_1n = lax.broadcasted_iota(jnp.int32, (1, n), 1)   # point (set-1) index i

    for bb in range(block_b):
        x1t = x1_ref[bb]      # (3, n)  set-1 points, lane-dense
        x2 = x2_ref[bb]       # (n, 3)  set-2 points, sublane-major

        # key[j, i] = bits(cost[j, i] + price[j]) with the item index j packed into
        # the low mantissa bits; price starts at 0.  cost + price >= 0, so int32
        # bit-pattern ordering matches float ordering everywhere below.
        cost0 = _pairwise_sq_dists(x2, x1t)
        key_ref[...] = (pltpu.bitcast(cost0, jnp.int32) & hi_mask) | row_n1
        ainv_ref[...] = jnp.full((n, 1), -1, jnp.int32)

        def body(step, carry):
            k = key_ref[...]                           # (n, n) packed value | j
            ainv = ainv_ref[...]                       # (n, 1)

            # Which set-1 points are currently owned by some item (sublane reduce).
            assigned = jnp.max(jnp.where(ainv == col_1n, 1.0, 0.0),
                               axis=0, keepdims=True) > 0.0           # (1, n)

            # ---- bidding phase: ONE packed sublane MIN -> best value + best item ----
            mn = jnp.min(k, axis=0, keepdims=True)                    # (1, n) packed
            best = pltpu.bitcast(mn & hi_mask, jnp.float32)           # (1, n)
            is_best = k == mn                            # (n, n); unique per column
            second = pltpu.bitcast(
                jnp.min(jnp.where(is_best, _POS_KEY, k),
                        axis=0, keepdims=True) & hi_mask,
                jnp.float32)                                          # (1, n)
            bid_inc = second - best + eps                             # (1, n) >= eps

            # ---- assignment phase: ONE packed lane MAX per item ----
            # bid increments are > 0 => bit pattern order-preserving; bidder index i
            # goes in the low mantissa bits, zeros mark "no bid".
            bid_key_row = pltpu.bitcast(
                (pltpu.bitcast(bid_inc, jnp.int32) & hi_mask) | col_1n,
                jnp.float32)                                          # (1, n)
            bid_keys = jnp.where(is_best & jnp.logical_not(assigned),
                                 bid_key_row, 0.0)                    # (n, n) >= 0
            mk = pltpu.bitcast(jnp.max(bid_keys, axis=1, keepdims=True),
                               jnp.int32)                             # (n, 1)
            max_inc = pltpu.bitcast(mk & hi_mask, jnp.float32)        # (n, 1)
            winner = mk & lo_mask                                     # (n, 1)
            has_bid = max_inc > 0.0                                   # (n, 1)

            # price[j] += max_inc (exactly 0 where no bid), folded into the keys.
            new_val = pltpu.bitcast(k & hi_mask, jnp.float32) + max_inc
            key_ref[...] = (pltpu.bitcast(new_val, jnp.int32) & hi_mask) | row_n1
            ainv_ref[...] = jnp.where(has_bid, winner, ainv)
            return carry

        lax.fori_loop(0, iters, body, 0)

        # ---- recover set1 -> set2 assignment and exact matched squared dist ----
        ainv = ainv_ref[...]                                           # (n, 1)
        own = ainv == col_1n                                           # (n, n)
        assign = jnp.max(jnp.where(own, row_n1, -1),
                         axis=0, keepdims=True)                        # (1, n)
        cost = _pairwise_sq_dists(x2, x1t)    # exact (packed keys are truncated)
        d = jnp.max(jnp.where(own, cost, 0.0), axis=0, keepdims=True)  # (1, n)

        dist_ref[bb] = d
        assign_ref[bb] = assign


def _pick_block_b(batch, n):
    """block_b > 1 only pays for small n; keep >= 2 grid steps when possible."""
    if n >= 512 or batch == 1:
        return 1
    cap = min(4, max(1, batch // 2))
    for bb in range(cap, 0, -1):
        if batch % bb == 0:
            return bb
    return 1


def emd_forward(input1, input2, eps, iters, block_b=None):
    """Pallas equivalent of emdModule()(input1, input2, eps, iters) (forward only)."""
    B, n, d = input1.shape
    assert input2.shape == (B, n, d) and d == 3
    assert B <= 512
    assert n % 8 == 0
    # Index field packed into the low mantissa bits of the keys; keep it small.
    assert (n - 1).bit_length() <= 14

    if block_b is None:
        block_b = _pick_block_b(B, n)
    assert B % block_b == 0

    x1t = jnp.transpose(input1.astype(jnp.float32), (0, 2, 1))   # (B, 3, n) lane-dense
    x2 = input2.astype(jnp.float32)                              # (B, n, 3)

    kernel = functools.partial(_emd_auction_kernel, n=n, block_b=block_b,
                               eps=float(eps), iters=int(iters))

    # Scoped-VMEM budget: (n, n) packed-key scratch + a few compiler-materialized
    # (n, n) temporaries + small IO double buffers; capped below physical VMEM
    # (v7x has only 64 MiB per TensorCore, v5e/v6e 128 MiB).
    try:
        vmem_cap = int(pltpu.get_tpu_info().vmem_capacity_bytes)
    except Exception:
        vmem_cap = 64 * 2**20
    need = 6 * n * n * 4 + 8 * 2**20
    vmem_limit = int(max(32 * 2**20, min(need, (vmem_cap * 17) // 20)))

    dist3, assign3 = pl.pallas_call(
        kernel,
        out_shape=(jax.ShapeDtypeStruct((B, 1, n), jnp.float32),
                   jax.ShapeDtypeStruct((B, 1, n), jnp.int32)),
        grid_spec=pltpu.PrefetchScalarGridSpec(
            num_scalar_prefetch=0,
            grid=(B // block_b,),
            in_specs=[pl.BlockSpec((block_b, 3, n), lambda b: (b, 0, 0)),
                      pl.BlockSpec((block_b, n, 3), lambda b: (b, 0, 0))],
            out_specs=[pl.BlockSpec((block_b, 1, n), lambda b: (b, 0, 0)),
                       pl.BlockSpec((block_b, 1, n), lambda b: (b, 0, 0))],
            scratch_shapes=[pltpu.VMEM((n, n), jnp.int32),   # packed (cost+price)|j
                            pltpu.VMEM((n, 1), jnp.int32)],  # ainv (item -> point)
        ),
        compiler_params=pltpu.CompilerParams(
            dimension_semantics=("parallel",),
            vmem_limit_bytes=vmem_limit),
    )(x1t, x2)

    return dist3.reshape(B, n), assign3.reshape(B, n)


if __name__ == "__main__":
    key = jax.random.PRNGKey(0)
    k1, k2 = jax.random.split(key)
    B, N = 4, 128
    x1 = jax.random.uniform(k1, (B, N, 3), dtype=jnp.float32)
    x2 = jax.random.uniform(k2, (B, N, 3), dtype=jnp.float32)

    dist, assignment = emd_forward(x1, x2, eps=0.02, iters=32)
    dist, assignment = jax.block_until_ready((dist, assignment))

    assert dist.shape == (B, N) and dist.dtype == jnp.float32
    assert assignment.shape == (B, N) and assignment.dtype == jnp.int32
    assert bool(jnp.all(jnp.isfinite(dist)))
    assert bool(jnp.all(dist >= 0.0))
    assert bool(jnp.all((assignment >= -1) & (assignment < N)))
    print("KERNEL_OK")
</pallas_src>

<mosaic_0001>
module attributes {stable_mosaic.version = 11 : i64} {
  func.func @_emd_auction_kernel(%arg0: i32, %arg1: memref<2x3x128xf32, #tpu.memory_space<vmem>>, %arg2: memref<2x128x3xf32, #tpu.memory_space<vmem>>, %arg3: memref<2x1x128xf32, #tpu.memory_space<vmem>>, %arg4: memref<2x1x128xi32, #tpu.memory_space<vmem>>, %arg5: memref<128x128xi32, #tpu.memory_space<vmem>>, %arg6: memref<128x1xi32, #tpu.memory_space<vmem>>) attributes {dimension_semantics = [#tpu.dimension_semantics<parallel>], iteration_bounds = array<i64: 2>, scalar_prefetch = 0 : i64, scratch_operands = 2 : i64, tpu.core_type = #tpu.core_type<tc>, window_params = [{transform_indices = @transform_0, window_bounds = array<i64: 2, 3, 128>}, {transform_indices = @transform_1, window_bounds = array<i64: 2, 128, 3>}, {transform_indices = @transform_2, window_bounds = array<i64: 2, 1, 128>}, {transform_indices = @transform_3, window_bounds = array<i64: 2, 1, 128>}]} {
    %0 = tpu.iota {dimensions = array<i32: 0>} : vector<128x1xi32>
    %1 = tpu.iota {dimensions = array<i32: 1>} : vector<1x128xi32>
    %c0 = arith.constant 0 : index
    %c0_0 = arith.constant 0 : index
    %c0_1 = arith.constant 0 : index
    %2 = vector.load %arg1[%c0, %c0_0, %c0_1] : memref<2x3x128xf32, #tpu.memory_space<vmem>>, vector<1x3x128xf32>
    %3 = vector.shape_cast %2 : vector<1x3x128xf32> to vector<3x128xf32>
    %c0_2 = arith.constant 0 : index
    %c0_3 = arith.constant 0 : index
    %c0_4 = arith.constant 0 : index
    %4 = vector.load %arg2[%c0_2, %c0_3, %c0_4] : memref<2x128x3xf32, #tpu.memory_space<vmem>>, vector<1x128x3xf32>
    %5 = vector.shape_cast %4 : vector<1x128x3xf32> to vector<128x3xf32>
    %6 = vector.extract_strided_slice %5 {offsets = [0, 0], sizes = [128, 1], strides = [1, 1]} : vector<128x3xf32> to vector<128x1xf32>
    %7 = vector.extract_strided_slice %3 {offsets = [0, 0], sizes = [1, 128], strides = [1, 1]} : vector<3x128xf32> to vector<1x128xf32>
    %8 = vector.broadcast %6 : vector<128x1xf32> to vector<128x128xf32>
    %9 = vector.broadcast %7 : vector<1x128xf32> to vector<128x128xf32>
    %10 = arith.subf %8, %9 : vector<128x128xf32>
    %11 = arith.mulf %10, %10 : vector<128x128xf32>
    %12 = vector.extract_strided_slice %5 {offsets = [0, 1], sizes = [128, 1], strides = [1, 1]} : vector<128x3xf32> to vector<128x1xf32>
    %13 = vector.extract_strided_slice %3 {offsets = [1, 0], sizes = [1, 128], strides = [1, 1]} : vector<3x128xf32> to vector<1x128xf32>
    %14 = vector.broadcast %12 : vector<128x1xf32> to vector<128x128xf32>
    %15 = vector.broadcast %13 : vector<1x128xf32> to vector<128x128xf32>
    %16 = arith.subf %14, %15 : vector<128x128xf32>
    %17 = arith.mulf %16, %16 : vector<128x128xf32>
    %18 = arith.addf %11, %17 : vector<128x128xf32>
    %19 = vector.extract_strided_slice %5 {offsets = [0, 2], sizes = [128, 1], strides = [1, 1]} : vector<128x3xf32> to vector<128x1xf32>
    %20 = vector.extract_strided_slice %3 {offsets = [2, 0], sizes = [1, 128], strides = [1, 1]} : vector<3x128xf32> to vector<1x128xf32>
    %21 = vector.broadcast %19 : vector<128x1xf32> to vector<128x128xf32>
    %22 = vector.broadcast %20 : vector<1x128xf32> to vector<128x128xf32>
    %23 = arith.subf %21, %22 : vector<128x128xf32>
    %24 = arith.mulf %23, %23 : vector<128x128xf32>
    %25 = arith.addf %18, %24 : vector<128x128xf32>
    %26 = tpu.bitcast %25 : vector<128x128xf32> -> vector<128x128xi32>
    %c-128_i32 = arith.constant -128 : i32
    %27 = vector.broadcast %c-128_i32 : i32 to vector<128x128xi32>
    %28 = arith.andi %26, %27 : vector<128x128xi32>
    %29 = vector.broadcast %0 : vector<128x1xi32> to vector<128x128xi32>
    %30 = arith.ori %28, %29 : vector<128x128xi32>
    %c0_5 = arith.constant 0 : index
    %c0_6 = arith.constant 0 : index
    %31 = vector.load %arg5[%c0_5, %c0_6] : memref<128x128xi32, #tpu.memory_space<vmem>>, vector<128x128xi32>
    tpu.vector_store %arg5[%c0_5, %c0_6], %30 {strides = array<i32>} : memref<128x128xi32, #tpu.memory_space<vmem>>, vector<128x128xi32>,
    %c-1_i32 = arith.constant -1 : i32
    %32 = vector.broadcast %c-1_i32 : i32 to vector<128x1xi32>
    %c0_7 = arith.constant 0 : index
    %c0_8 = arith.constant 0 : index
    %33 = vector.load %arg6[%c0_7, %c0_8] : memref<128x1xi32, #tpu.memory_space<vmem>>, vector<128x1xi32>
    tpu.vector_store %arg6[%c0_7, %c0_8], %32 {strides = array<i32>} : memref<128x1xi32, #tpu.memory_space<vmem>>, vector<128x1xi32>,
    %c-128_i32_9 = arith.constant -128 : i32
    %c127_i32 = arith.constant 127 : i32
    %c0_i32 = arith.constant 0 : i32
    %c32_i32 = arith.constant 32 : i32
    %34 = arith.addi %c0_i32, %c32_i32 : i32
    %c1_i32 = arith.constant 1 : i32
    scf.for %arg7 = %c0_i32 to %34 step %c1_i32  : i32 {
      %c0_49 = arith.constant 0 : index
      %c0_50 = arith.constant 0 : index
      %148 = vector.load %arg5[%c0_49, %c0_50] : memref<128x128xi32, #tpu.memory_space<vmem>>, vector<128x128xi32>
      %c0_51 = arith.constant 0 : index
      %c0_52 = arith.constant 0 : index
      %149 = vector.load %arg6[%c0_51, %c0_52] : memref<128x1xi32, #tpu.memory_space<vmem>>, vector<128x1xi32>
      %150 = vector.broadcast %149 : vector<128x1xi32> to vector<128x128xi32>
      %151 = vector.broadcast %1 : vector<1x128xi32> to vector<128x128xi32>
      %152 = arith.cmpi eq, %150, %151 : vector<128x128xi32>
      %cst_53 = arith.constant 1.000000e+00 : f32
      %cst_54 = arith.constant 0.000000e+00 : f32
      %153 = vector.broadcast %cst_53 : f32 to vector<128x128xf32>
      %154 = vector.broadcast %cst_54 : f32 to vector<128x128xf32>
      %155 = arith.select %152, %153, %154 : vector<128x128xi1>, vector<128x128xf32>
      %cst_55 = arith.constant dense<0xFF800000> : vector<128xf32>
      %156 = vector.multi_reduction <maximumf>, %155, %cst_55 [0] : vector<128x128xf32> to vector<128xf32>
      %157 = vector.shape_cast %156 : vector<128xf32> to vector<1x128xf32>
      %cst_56 = arith.constant 0.000000e+00 : f32
      %158 = vector.broadcast %cst_56 : f32 to vector<1x128xf32>
      %159 = arith.cmpf ogt, %157, %158 : vector<1x128xf32>
      %cst_57 = arith.constant dense<2147483647> : vector<128xi32>
      %160 = vector.multi_reduction <minsi>, %148, %cst_57 [0] : vector<128x128xi32> to vector<128xi32>
      %161 = vector.shape_cast %160 : vector<128xi32> to vector<1x128xi32>
      %162 = vector.broadcast %c-128_i32_9 : i32 to vector<1x128xi32>
      %163 = arith.andi %161, %162 : vector<1x128xi32>
      %164 = tpu.bitcast %163 : vector<1x128xi32> -> vector<1x128xf32>
      %165 = vector.broadcast %161 : vector<1x128xi32> to vector<128x128xi32>
      %166 = arith.cmpi eq, %148, %165 : vector<128x128xi32>
      %c2139095039_i32 = arith.constant 2139095039 : i32
      %167 = vector.broadcast %c2139095039_i32 : i32 to vector<128x128xi32>
      %168 = arith.select %166, %167, %148 : vector<128x128xi1>, vector<128x128xi32>
      %cst_58 = arith.constant dense<2147483647> : vector<128xi32>
      %169 = vector.multi_reduction <minsi>, %168, %cst_58 [0] : vector<128x128xi32> to vector<128xi32>
      %170 = vector.shape_cast %169 : vector<128xi32> to vector<1x128xi32>
      %171 = vector.broadcast %c-128_i32_9 : i32 to vector<1x128xi32>
      %172 = arith.andi %170, %171 : vector<1x128xi32>
      %173 = tpu.bitcast %172 : vector<1x128xi32> -> vector<1x128xf32>
      %174 = arith.subf %173, %164 : vector<1x128xf32>
      %cst_59 = arith.constant 2.000000e-02 : f32
      %175 = vector.broadcast %cst_59 : f32 to vector<1x128xf32>
      %176 = arith.addf %174, %175 : vector<1x128xf32>
      %177 = tpu.bitcast %176 : vector<1x128xf32> -> vector<1x128xi32>
      %178 = vector.broadcast %c-128_i32_9 : i32 to vector<1x128xi32>
      %179 = arith.andi %177, %178 : vector<1x128xi32>
      %180 = arith.ori %179, %1 : vector<1x128xi32>
      %181 = tpu.bitcast %180 : vector<1x128xi32> -> vector<1x128xf32>
      %cst_60 = arith.constant dense<true> : vector<1x128xi1>
      %182 = arith.xori %159, %cst_60 : vector<1x128xi1>
      %183 = vector.broadcast %182 : vector<1x128xi1> to vector<128x128xi1>
      %184 = arith.andi %166, %183 : vector<128x128xi1>
      %cst_61 = arith.constant 0.000000e+00 : f32
      %185 = vector.shape_cast %181 : vector<1x128xf32> to vector<1x128xf32>
      %186 = vector.broadcast %185 : vector<1x128xf32> to vector<128x128xf32>
      %187 = vector.broadcast %cst_61 : f32 to vector<128x128xf32>
      %188 = arith.select %184, %186, %187 : vector<128x128xi1>, vector<128x128xf32>
      %cst_62 = arith.constant dense<0xFF800000> : vector<128xf32>
      %189 = vector.multi_reduction <maximumf>, %188, %cst_62 [1] : vector<128x128xf32> to vector<128xf32>
      %190 = vector.shape_cast %189 : vector<128xf32> to vector<128x1xf32>
      %191 = tpu.bitcast %190 : vector<128x1xf32> -> vector<128x1xi32>
      %192 = vector.broadcast %c-128_i32_9 : i32 to vector<128x1xi32>
      %193 = arith.andi %191, %192 : vector<128x1xi32>
      %194 = tpu.bitcast %193 : vector<128x1xi32> -> vector<128x1xf32>
      %195 = vector.broadcast %c127_i32 : i32 to vector<128x1xi32>
      %196 = arith.andi %191, %195 : vector<128x1xi32>
      %cst_63 = arith.constant 0.000000e+00 : f32
      %197 = vector.broadcast %cst_63 : f32 to vector<128x1xf32>
      %198 = arith.cmpf ogt, %194, %197 : vector<128x1xf32>
      %199 = vector.broadcast %c-128_i32_9 : i32 to vector<128x128xi32>
      %200 = arith.andi %148, %199 : vector<128x128xi32>
      %201 = tpu.bitcast %200 : vector<128x128xi32> -> vector<128x128xf32>
      %202 = vector.broadcast %194 : vector<128x1xf32> to vector<128x128xf32>
      %203 = arith.addf %201, %202 : vector<128x128xf32>
      %204 = tpu.bitcast %203 : vector<128x128xf32> -> vector<128x128xi32>
      %205 = vector.broadcast %c-128_i32_9 : i32 to vector<128x128xi32>
      %206 = arith.andi %204, %205 : vector<128x128xi32>
      %207 = vector.broadcast %0 : vector<128x1xi32> to vector<128x128xi32>
      %208 = arith.ori %206, %207 : vector<128x128xi32>
      %c0_64 = arith.constant 0 : index
      %c0_65 = arith.constant 0 : index
      %209 = vector.load %arg5[%c0_64, %c0_65] : memref<128x128xi32, #tpu.memory_space<vmem>>, vector<128x128xi32>
      tpu.vector_store %arg5[%c0_64, %c0_65], %208 {strides = array<i32>} : memref<128x128xi32, #tpu.memory_space<vmem>>, vector<128x128xi32>,
      %210 = arith.select %198, %196, %149 : vector<128x1xi1>, vector<128x1xi32>
      %c0_66 = arith.constant 0 : index
      %c0_67 = arith.constant 0 : index
      %211 = vector.load %arg6[%c0_66, %c0_67] : memref<128x1xi32, #tpu.memory_space<vmem>>, vector<128x1xi32>
      tpu.vector_store %arg6[%c0_66, %c0_67], %210 {strides = array<i32>} : memref<128x1xi32, #tpu.memory_space<vmem>>, vector<128x1xi32>,
    }
    %c0_10 = arith.constant 0 : index
    %c0_11 = arith.constant 0 : index
    %35 = vector.load %arg6[%c0_10, %c0_11] : memref<128x1xi32, #tpu.memory_space<vmem>>, vector<128x1xi32>
    %36 = vector.broadcast %35 : vector<128x1xi32> to vector<128x128xi32>
    %37 = vector.broadcast %1 : vector<1x128xi32> to vector<128x128xi32>
    %38 = arith.cmpi eq, %36, %37 : vector<128x128xi32>
    %c-1_i32_12 = arith.constant -1 : i32
    %39 = vector.shape_cast %0 : vector<128x1xi32> to vector<128x1xi32>
    %40 = vector.broadcast %39 : vector<128x1xi32> to vector<128x128xi32>
    %41 = vector.broadcast %c-1_i32_12 : i32 to vector<128x128xi32>
    %42 = arith.select %38, %40, %41 : vector<128x128xi1>, vector<128x128xi32>
    %cst = arith.constant dense<-2147483648> : vector<128xi32>
    %43 = vector.multi_reduction <maxsi>, %42, %cst [0] : vector<128x128xi32> to vector<128xi32>
    %44 = vector.shape_cast %43 : vector<128xi32> to vector<1x128xi32>
    %45 = vector.extract_strided_slice %5 {offsets = [0, 0], sizes = [128, 1], strides = [1, 1]} : vector<128x3xf32> to vector<128x1xf32>
    %46 = vector.extract_strided_slice %3 {offsets = [0, 0], sizes = [1, 128], strides = [1, 1]} : vector<3x128xf32> to vector<1x128xf32>
    %47 = vector.broadcast %45 : vector<128x1xf32> to vector<128x128xf32>
    %48 = vector.broadcast %46 : vector<1x128xf32> to vector<128x128xf32>
    %49 = arith.subf %47, %48 : vector<128x128xf32>
    %50 = arith.mulf %49, %49 : vector<128x128xf32>
    %51 = vector.extract_strided_slice %5 {offsets = [0, 1], sizes = [128, 1], strides = [1, 1]} : vector<128x3xf32> to vector<128x1xf32>
    %52 = vector.extract_strided_slice %3 {offsets = [1, 0], sizes = [1, 128], strides = [1, 1]} : vector<3x128xf32> to vector<1x128xf32>
    %53 = vector.broadcast %51 : vector<128x1xf32> to vector<128x128xf32>
    %54 = vector.broadcast %52 : vector<1x128xf32> to vector<128x128xf32>
    %55 = arith.subf %53, %54 : vector<128x128xf32>
    %56 = arith.mulf %55, %55 : vector<128x128xf32>
    %57 = arith.addf %50, %56 : vector<128x128xf32>
    %58 = vector.extract_strided_slice %5 {offsets = [0, 2], sizes = [128, 1], strides = [1, 1]} : vector<128x3xf32> to vector<128x1xf32>
    %59 = vector.extract_strided_slice %3 {offsets = [2, 0], sizes = [1, 128], strides = [1, 1]} : vector<3x128xf32> to vector<1x128xf32>
    %60 = vector.broadcast %58 : vector<128x1xf32> to vector<128x128xf32>
    %61 = vector.broadcast %59 : vector<1x128xf32> to vector<128x128xf32>
    %62 = arith.subf %60, %61 : vector<128x128xf32>
    %63 = arith.mulf %62, %62 : vector<128x128xf32>
    %64 = arith.addf %57, %63 : vector<128x128xf32>
    %cst_13 = arith.constant 0.000000e+00 : f32
    %65 = vector.broadcast %cst_13 : f32 to vector<128x128xf32>
    %66 = arith.select %38, %64, %65 : vector<128x128xi1>, vector<128x128xf32>
    %cst_14 = arith.constant dense<0xFF800000> : vector<128xf32>
    %67 = vector.multi_reduction <maximumf>, %66, %cst_14 [0] : vector<128x128xf32> to vector<128xf32>
    %68 = vector.shape_cast %67 : vector<128xf32> to vector<1x128xf32>
    %c0_15 = arith.constant 0 : index
    %c0_16 = arith.constant 0 : index
    %c0_17 = arith.constant 0 : index
    %69 = vector.load %arg3[%c0_15, %c0_16, %c0_17] : memref<2x1x128xf32, #tpu.memory_space<vmem>>, vector<1x1x128xf32>
    %70 = vector.shape_cast %69 : vector<1x1x128xf32> to vector<1x128xf32>
    %71 = vector.shape_cast %68 : vector<1x128xf32> to vector<1x1x128xf32>
    tpu.vector_store %arg3[%c0_15, %c0_16, %c0_17], %71 {strides = array<i32>} : memref<2x1x128xf32, #tpu.memory_space<vmem>>, vector<1x1x128xf32>,
    %c0_18 = arith.constant 0 : index
    %c0_19 = arith.constant 0 : index
    %c0_20 = arith.constant 0 : index
    %72 = vector.load %arg4[%c0_18, %c0_19, %c0_20] : memref<2x1x128xi32, #tpu.memory_space<vmem>>, vector<1x1x128xi32>
    %73 = vector.shape_cast %72 : vector<1x1x128xi32> to vector<1x128xi32>
    %74 = vector.shape_cast %44 : vector<1x128xi32> to vector<1x1x128xi32>
    tpu.vector_store %arg4[%c0_18, %c0_19, %c0_20], %74 {strides = array<i32>} : memref<2x1x128xi32, #tpu.memory_space<vmem>>, vector<1x1x128xi32>,
    %c1 = arith.constant 1 : index
    %c0_21 = arith.constant 0 : index
    %c0_22 = arith.constant 0 : index
    %75 = vector.load %arg1[%c1, %c0_21, %c0_22] : memref<2x3x128xf32, #tpu.memory_space<vmem>>, vector<1x3x128xf32>
    %76 = vector.shape_cast %75 : vector<1x3x128xf32> to vector<3x128xf32>
    %c1_23 = arith.constant 1 : index
    %c0_24 = arith.constant 0 : index
    %c0_25 = arith.constant 0 : index
    %77 = vector.load %arg2[%c1_23, %c0_24, %c0_25] : memref<2x128x3xf32, #tpu.memory_space<vmem>>, vector<1x128x3xf32>
    %78 = vector.shape_cast %77 : vector<1x128x3xf32> to vector<128x3xf32>
    %79 = vector.extract_strided_slice %78 {offsets = [0, 0], sizes = [128, 1], strides = [1, 1]} : vector<128x3xf32> to vector<128x1xf32>
    %80 = vector.extract_strided_slice %76 {offsets = [0, 0], sizes = [1, 128], strides = [1, 1]} : vector<3x128xf32> to vector<1x128xf32>
    %81 = vector.broadcast %79 : vector<128x1xf32> to vector<128x128xf32>
    %82 = vector.broadcast %80 : vector<1x128xf32> to vector<128x128xf32>
    %83 = arith.subf %81, %82 : vector<128x128xf32>
    %84 = arith.mulf %83, %83 : vector<128x128xf32>
    %85 = vector.extract_strided_slice %78 {offsets = [0, 1], sizes = [128, 1], strides = [1, 1]} : vector<128x3xf32> to vector<128x1xf32>
    %86 = vector.extract_strided_slice %76 {offsets = [1, 0], sizes = [1, 128], strides = [1, 1]} : vector<3x128xf32> to vector<1x128xf32>
    %87 = vector.broadcast %85 : vector<128x1xf32> to vector<128x128xf32>
    %88 = vector.broadcast %86 : vector<1x128xf32> to vector<128x128xf32>
    %89 = arith.subf %87, %88 : vector<128x128xf32>
    %90 = arith.mulf %89, %89 : vector<128x128xf32>
    %91 = arith.addf %84, %90 : vector<128x128xf32>
    %92 = vector.extract_strided_slice %78 {offsets = [0, 2], sizes = [128, 1], strides = [1, 1]} : vector<128x3xf32> to vector<128x1xf32>
    %93 = vector.extract_strided_slice %76 {offsets = [2, 0], sizes = [1, 128], strides = [1, 1]} : vector<3x128xf32> to vector<1x128xf32>
    %94 = vector.broadcast %92 : vector<128x1xf32> to vector<128x128xf32>
    %95 = vector.broadcast %93 : vector<1x128xf32> to vector<128x128xf32>
    %96 = arith.subf %94, %95 : vector<128x128xf32>
    %97 = arith.mulf %96, %96 : vector<128x128xf32>
    %98 = arith.addf %91, %97 : vector<128x128xf32>
    %99 = tpu.bitcast %98 : vector<128x128xf32> -> vector<128x128xi32>
    %c-128_i32_26 = arith.constant -128 : i32
    %100 = vector.broadcast %c-128_i32_26 : i32 to vector<128x128xi32>
    %101 = arith.andi %99, %100 : vector<128x128xi32>
    %102 = vector.broadcast %0 : vector<128x1xi32> to vector<128x128xi32>
    %103 = arith.ori %101, %102 : vector<128x128xi32>
    %c0_27 = arith.constant 0 : index
    %c0_28 = arith.constant 0 : index
    %104 = vector.load %arg5[%c0_27, %c0_28] : memref<128x128xi32, #tpu.memory_space<vmem>>, vector<128x128xi32>
    tpu.vector_store %arg5[%c0_27, %c0_28], %103 {strides = array<i32>} : memref<128x128xi32, #tpu.memory_space<vmem>>, vector<128x128xi32>,
    %c-1_i32_29 = arith.constant -1 : i32
    %105 = vector.broadcast %c-1_i32_29 : i32 to vector<128x1xi32>
    %c0_30 = arith.constant 0 : index
    %c0_31 = arith.constant 0 : index
    %106 = vector.load %arg6[%c0_30, %c0_31] : memref<128x1xi32, #tpu.memory_space<vmem>>, vector<128x1xi32>
    tpu.vector_store %arg6[%c0_30, %c0_31], %105 {strides = array<i32>} : memref<128x1xi32, #tpu.memory_space<vmem>>, vector<128x1xi32>,
    %c-128_i32_32 = arith.constant -128 : i32
    %c127_i32_33 = arith.constant 127 : i32
    %c0_i32_34 = arith.constant 0 : i32
    %c32_i32_35 = arith.constant 32 : i32
    %107 = arith.addi %c0_i32_34, %c32_i32_35 : i32
    %c1_i32_36 = arith.constant 1 : i32
    scf.for %arg7 = %c0_i32_34 to %107 step %c1_i32_36  : i32 {
      %c0_49 = arith.constant 0 : index
      %c0_50 = arith.constant 0 : index
      %148 = vector.load %arg5[%c0_49, %c0_50] : memref<128x128xi32, #tpu.memory_space<vmem>>, vector<128x128xi32>
      %c0_51 = arith.constant 0 : index
      %c0_52 = arith.constant 0 : index
      %149 = vector.load %arg6[%c0_51, %c0_52] : memref<128x1xi32, #tpu.memory_space<vmem>>, vector<128x1xi32>
      %150 = vector.broadcast %149 : vector<128x1xi32> to vector<128x128xi32>
      %151 = vector.broadcast %1 : vector<1x128xi32> to vector<128x128xi32>
      %152 = arith.cmpi eq, %150, %151 : vector<128x128xi32>
      %cst_53 = arith.constant 1.000000e+00 : f32
      %cst_54 = arith.constant 0.000000e+00 : f32
      %153 = vector.broadcast %cst_53 : f32 to vector<128x128xf32>
      %154 = vector.broadcast %cst_54 : f32 to vector<128x128xf32>
      %155 = arith.select %152, %153, %154 : vector<128x128xi1>, vector<128x128xf32>
      %cst_55 = arith.constant dense<0xFF800000> : vector<128xf32>
      %156 = vector.multi_reduction <maximumf>, %155, %cst_55 [0] : vector<128x128xf32> to vector<128xf32>
      %157 = vector.shape_cast %156 : vector<128xf32> to vector<1x128xf32>
      %cst_56 = arith.constant 0.000000e+00 : f32
      %158 = vector.broadcast %cst_56 : f32 to vector<1x128xf32>
      %159 = arith.cmpf ogt, %157, %158 : vector<1x128xf32>
      %cst_57 = arith.constant dense<2147483647> : vector<128xi32>
      %160 = vector.multi_reduction <minsi>, %148, %cst_57 [0] : vector<128x128xi32> to vector<128xi32>
      %161 = vector.shape_cast %160 : vector<128xi32> to vector<1x128xi32>
      %162 = vector.broadcast %c-128_i32_32 : i32 to vector<1x128xi32>
      %163 = arith.andi %161, %162 : vector<1x128xi32>
      %164 = tpu.bitcast %163 : vector<1x128xi32> -> vector<1x128xf32>
      %165 = vector.broadcast %161 : vector<1x128xi32> to vector<128x128xi32>
      %166 = arith.cmpi eq, %148, %165 : vector<128x128xi32>
      %c2139095039_i32 = arith.constant 2139095039 : i32
      %167 = vector.broadcast %c2139095039_i32 : i32 to vector<128x128xi32>
      %168 = arith.select %166, %167, %148 : vector<128x128xi1>, vector<128x128xi32>
      %cst_58 = arith.constant dense<2147483647> : vector<128xi32>
      %169 = vector.multi_reduction <minsi>, %168, %cst_58 [0] : vector<128x128xi32> to vector<128xi32>
      %170 = vector.shape_cast %169 : vector<128xi32> to vector<1x128xi32>
      %171 = vector.broadcast %c-128_i32_32 : i32 to vector<1x128xi32>
      %172 = arith.andi %170, %171 : vector<1x128xi32>
      %173 = tpu.bitcast %172 : vector<1x128xi32> -> vector<1x128xf32>
      %174 = arith.subf %173, %164 : vector<1x128xf32>
      %cst_59 = arith.constant 2.000000e-02 : f32
      %175 = vector.broadcast %cst_59 : f32 to vector<1x128xf32>
      %176 = arith.addf %174, %175 : vector<1x128xf32>
      %177 = tpu.bitcast %176 : vector<1x128xf32> -> vector<1x128xi32>
      %178 = vector.broadcast %c-128_i32_32 : i32 to vector<1x128xi32>
      %179 = arith.andi %177, %178 : vector<1x128xi32>
      %180 = arith.ori %179, %1 : vector<1x128xi32>
      %181 = tpu.bitcast %180 : vector<1x128xi32> -> vector<1x128xf32>
      %cst_60 = arith.constant dense<true> : vector<1x128xi1>
      %182 = arith.xori %159, %cst_60 : vector<1x128xi1>
      %183 = vector.broadcast %182 : vector<1x128xi1> to vector<128x128xi1>
      %184 = arith.andi %166, %183 : vector<128x128xi1>
      %cst_61 = arith.constant 0.000000e+00 : f32
      %185 = vector.shape_cast %181 : vector<1x128xf32> to vector<1x128xf32>
      %186 = vector.broadcast %185 : vector<1x128xf32> to vector<128x128xf32>
      %187 = vector.broadcast %cst_61 : f32 to vector<128x128xf32>
      %188 = arith.select %184, %186, %187 : vector<128x128xi1>, vector<128x128xf32>
      %cst_62 = arith.constant dense<0xFF800000> : vector<128xf32>
      %189 = vector.multi_reduction <maximumf>, %188, %cst_62 [1] : vector<128x128xf32> to vector<128xf32>
      %190 = vector.shape_cast %189 : vector<128xf32> to vector<128x1xf32>
      %191 = tpu.bitcast %190 : vector<128x1xf32> -> vector<128x1xi32>
      %192 = vector.broadcast %c-128_i32_32 : i32 to vector<128x1xi32>
      %193 = arith.andi %191, %192 : vector<128x1xi32>
      %194 = tpu.bitcast %193 : vector<128x1xi32> -> vector<128x1xf32>
      %195 = vector.broadcast %c127_i32_33 : i32 to vector<128x1xi32>
      %196 = arith.andi %191, %195 : vector<128x1xi32>
      %cst_63 = arith.constant 0.000000e+00 : f32
      %197 = vector.broadcast %cst_63 : f32 to vector<128x1xf32>
      %198 = arith.cmpf ogt, %194, %197 : vector<128x1xf32>
      %199 = vector.broadcast %c-128_i32_32 : i32 to vector<128x128xi32>
      %200 = arith.andi %148, %199 : vector<128x128xi32>
      %201 = tpu.bitcast %200 : vector<128x128xi32> -> vector<128x128xf32>
      %202 = vector.broadcast %194 : vector<128x1xf32> to vector<128x128xf32>
      %203 = arith.addf %201, %202 : vector<128x128xf32>
      %204 = tpu.bitcast %203 : vector<128x128xf32> -> vector<128x128xi32>
      %205 = vector.broadcast %c-128_i32_32 : i32 to vector<128x128xi32>
      %206 = arith.andi %204, %205 : vector<128x128xi32>
      %207 = vector.broadcast %0 : vector<128x1xi32> to vector<128x128xi32>
      %208 = arith.ori %206, %207 : vector<128x128xi32>
      %c0_64 = arith.constant 0 : index
      %c0_65 = arith.constant 0 : index
      %209 = vector.load %arg5[%c0_64, %c0_65] : memref<128x128xi32, #tpu.memory_space<vmem>>, vector<128x128xi32>
      tpu.vector_store %arg5[%c0_64, %c0_65], %208 {strides = array<i32>} : memref<128x128xi32, #tpu.memory_space<vmem>>, vector<128x128xi32>,
      %210 = arith.select %198, %196, %149 : vector<128x1xi1>, vector<128x1xi32>
      %c0_66 = arith.constant 0 : index
      %c0_67 = arith.constant 0 : index
      %211 = vector.load %arg6[%c0_66, %c0_67] : memref<128x1xi32, #tpu.memory_space<vmem>>, vector<128x1xi32>
      tpu.vector_store %arg6[%c0_66, %c0_67], %210 {strides = array<i32>} : memref<128x1xi32, #tpu.memory_space<vmem>>, vector<128x1xi32>,
    }
    %c0_37 = arith.constant 0 : index
    %c0_38 = arith.constant 0 : index
    %108 = vector.load %arg6[%c0_37, %c0_38] : memref<128x1xi32, #tpu.memory_space<vmem>>, vector<128x1xi32>
    %109 = vector.broadcast %108 : vector<128x1xi32> to vector<128x128xi32>
    %110 = vector.broadcast %1 : vector<1x128xi32> to vector<128x128xi32>
    %111 = arith.cmpi eq, %109, %110 : vector<128x128xi32>
    %c-1_i32_39 = arith.constant -1 : i32
    %112 = vector.shape_cast %0 : vector<128x1xi32> to vector<128x1xi32>
    %113 = vector.broadcast %112 : vector<128x1xi32> to vector<128x128xi32>
    %114 = vector.broadcast %c-1_i32_39 : i32 to vector<128x128xi32>
    %115 = arith.select %111, %113, %114 : vector<128x128xi1>, vector<128x128xi32>
    %cst_40 = arith.constant dense<-2147483648> : vector<128xi32>
    %116 = vector.multi_reduction <maxsi>, %115, %cst_40 [0] : vector<128x128xi32> to vector<128xi32>
    %117 = vector.shape_cast %116 : vector<128xi32> to vector<1x128xi32>
    %118 = vector.extract_strided_slice %78 {offsets = [0, 0], sizes = [128, 1], strides = [1, 1]} : vector<128x3xf32> to vector<128x1xf32>
    %119 = vector.extract_strided_slice %76 {offsets = [0, 0], sizes = [1, 128], strides = [1, 1]} : vector<3x128xf32> to vector<1x128xf32>
    %120 = vector.broadcast %118 : vector<128x1xf32> to vector<128x128xf32>
    %121 = vector.broadcast %119 : vector<1x128xf32> to vector<128x128xf32>
    %122 = arith.subf %120, %121 : vector<128x128xf32>
    %123 = arith.mulf %122, %122 : vector<128x128xf32>
    %124 = vector.extract_strided_slice %78 {offsets = [0, 1], sizes = [128, 1], strides = [1, 1]} : vector<128x3xf32> to vector<128x1xf32>
    %125 = vector.extract_strided_slice %76 {offsets = [1, 0], sizes = [1, 128], strides = [1, 1]} : vector<3x128xf32> to vector<1x128xf32>
    %126 = vector.broadcast %124 : vector<128x1xf32> to vector<128x128xf32>
    %127 = vector.broadcast %125 : vector<1x128xf32> to vector<128x128xf32>
    %128 = arith.subf %126, %127 : vector<128x128xf32>
    %129 = arith.mulf %128, %128 : vector<128x128xf32>
    %130 = arith.addf %123, %129 : vector<128x128xf32>
    %131 = vector.extract_strided_slice %78 {offsets = [0, 2], sizes = [128, 1], strides = [1, 1]} : vector<128x3xf32> to vector<128x1xf32>
    %132 = vector.extract_strided_slice %76 {offsets = [2, 0], sizes = [1, 128], strides = [1, 1]} : vector<3x128xf32> to vector<1x128xf32>
    %133 = vector.broadcast %131 : vector<128x1xf32> to vector<128x128xf32>
    %134 = vector.broadcast %132 : vector<1x128xf32> to vector<128x128xf32>
    %135 = arith.subf %133, %134 : vector<128x128xf32>
    %136 = arith.mulf %135, %135 : vector<128x128xf32>
    %137 = arith.addf %130, %136 : vector<128x128xf32>
    %cst_41 = arith.constant 0.000000e+00 : f32
    %138 = vector.broadcast %cst_41 : f32 to vector<128x128xf32>
    %139 = arith.select %111, %137, %138 : vector<128x128xi1>, vector<128x128xf32>
    %cst_42 = arith.constant dense<0xFF800000> : vector<128xf32>
    %140 = vector.multi_reduction <maximumf>, %139, %cst_42 [0] : vector<128x128xf32> to vector<128xf32>
    %141 = vector.shape_cast %140 : vector<128xf32> to vector<1x128xf32>
    %c1_43 = arith.constant 1 : index
    %c0_44 = arith.constant 0 : index
    %c0_45 = arith.constant 0 : index
    %142 = vector.load %arg3[%c1_43, %c0_44, %c0_45] : memref<2x1x128xf32, #tpu.memory_space<vmem>>, vector<1x1x128xf32>
    %143 = vector.shape_cast %142 : vector<1x1x128xf32> to vector<1x128xf32>
    %144 = vector.shape_cast %141 : vector<1x128xf32> to vector<1x1x128xf32>
    tpu.vector_store %arg3[%c1_43, %c0_44, %c0_45], %144 {strides = array<i32>} : memref<2x1x128xf32, #tpu.memory_space<vmem>>, vector<1x1x128xf32>,
    %c1_46 = arith.constant 1 : index
    %c0_47 = arith.constant 0 : index
    %c0_48 = arith.constant 0 : index
    %145 = vector.load %arg4[%c1_46, %c0_47, %c0_48] : memref<2x1x128xi32, #tpu.memory_space<vmem>>, vector<1x1x128xi32>
    %146 = vector.shape_cast %145 : vector<1x1x128xi32> to vector<1x128xi32>
    %147 = vector.shape_cast %117 : vector<1x128xi32> to vector<1x1x128xi32>
    tpu.vector_store %arg4[%c1_46, %c0_47, %c0_48], %147 {strides = array<i32>} : memref<2x1x128xi32, #tpu.memory_space<vmem>>, vector<1x1x128xi32>,
    return
  }
  func.func @transform_0(%arg0: i32) -> (i32, i32, i32) {
    %c0_i32 = arith.constant 0 : i32
    %c0_i32_0 = arith.constant 0 : i32
    %c0_i32_1 = arith.constant 0 : i32
    return %arg0, %c0_i32, %c0_i32_0 : i32, i32, i32
  }
  func.func @transform_1(%arg0: i32) -> (i32, i32, i32) {
    %c0_i32 = arith.constant 0 : i32
    %c0_i32_0 = arith.constant 0 : i32
    %c0_i32_1 = arith.constant 0 : i32
    return %arg0, %c0_i32, %c0_i32_0 : i32, i32, i32
  }
  func.func @transform_2(%arg0: i32) -> (i32, i32, i32) {
    %c0_i32 = arith.constant 0 : i32
    %c0_i32_0 = arith.constant 0 : i32
    %c0_i32_1 = arith.constant 0 : i32
    return %arg0, %c0_i32, %c0_i32_0 : i32, i32, i32
  }
  func.func @transform_3(%arg0: i32) -> (i32, i32, i32) {
    %c0_i32 = arith.constant 0 : i32
    %c0_i32_0 = arith.constant 0 : i32
    %c0_i32_1 = arith.constant 0 : i32
    return %arg0, %c0_i32, %c0_i32_0 : i32, i32, i32
  }
}

</mosaic_0001>

<llo_original>
// kernel: tpu_custom_call.1
$region0: #{tpu_custom_call.1}
  #allocation0 [shape = 'u32[]', space=smem, size = 0x4, offset = 0x4, fixed_abs, tag = 'smem constant byte address 0x4 - core index']
  #allocation1 [shape = 'u32[144,128]{1,0:T(1,128)}', space=vmem, size = 0x12000, scoped, tag = 'internal scratch']
  #allocation2 [shape = 's32[128,128]{1,0:T(8,128)}', space=vmem, size = 0x10000, scoped, tag = 'scratch operand']
  #allocation3 [shape = 's32[128,1]{1,0:T(8,128)}', space=vmem, size = 0x10000, scoped, tag = 'scratch operand']
  %s0 = inlined_call_operand.vmem [shape: f32[4,3,128], index: 0, kind: input, shape index: {}]
  %s1 = inlined_call_operand.vmem [shape: f32[4,128,3], index: 1, kind: input, shape index: {}]
  %s2 = inlined_call_operand.hbm [shape: f32[4,1,128], index: 2, kind: output, shape index: {0}]
  %s3 = inlined_call_operand.hbm [shape: s32[4,1,128], index: 3, kind: output, shape index: {1}]
  %4 = xla_tuple %s2, %s3
  %s5 = sld [smem:[#allocation0]]
  $region63: #{tpu_custom_call.1} parent=0
    _
  %s7 = ssub.s32 1, %s5
  %s8 = scalar_select 0, %s7, %s5
  $region1: #{tpu_custom_call.1} parent=0
    #allocation4 [shape = 'u8[2048]{0}', space=vmem, size = 0x800, scoped, tag = 'output window, operand 0']
    #allocation5 [shape = 's32[2]{0}', space=sflag, size = 0x8, scoped, tag = 'scoped memory for tpu_custom_call.1']
    #allocation6 [shape = 'u8[2048]{0}', space=vmem, size = 0x800, scoped, tag = 'output window, operand 1']
    #allocation7 [shape = 's32[2]{0}', space=sflag, size = 0x8, scoped, tag = 'scoped memory for tpu_custom_call.1']
    %9 = vsyncpa [#allocation5], 0
    %s10 = scalar_lea.sflag [#allocation5], 1
    %11 = vsyncpa %s10, 0
    %12 = vsyncpa [#allocation7], 0
    %s13 = scalar_lea.sflag [#allocation7], 1
    %14 = vsyncpa %s13, 0
    loop: start=0, step=1, limit=4
    $region2: #{tpu_custom_call.1} parent=1 // loop_pre_header
      _
    $region3: #{tpu_custom_call.1} parent=1 // loop_header
      %s16 = sphi 0, %s20
      %p17 = scmp.ge.s32.totalorder %s16, 4
      %s26 = sphi 0, %s28
      %s29 = sphi 0, %s26
      %s30 = sphi 0, %s29
      %s46 = sphi 0, %s30
      %s52 = sphi 0, %s54
      %s55 = sphi 0, %s52
      %s56 = sphi 0, %s55
      %s72 = sphi 0, %s56
      %s78 = sphi 0, %s80
      %s81 = sphi 0, %s78
      %s82 = sphi 0, %s81
      %s98 = sphi 0, %s82
      %s104 = sphi 0, %s106
      %s107 = sphi 0, %s104
      %s108 = sphi 0, %s107
      %s124 = sphi 0, %s108
    $region4: #{tpu_custom_call.1} parent=1 // loop_header_branch
      %19 = sbr.rel (%p17) target = $region8
    $region5: #{tpu_custom_call.1} parent=1 // loop_body
      %s21 = ssub.s32 %s16, 1
      %s22 = ssub.s32 %s16, 2
      %s23 = sadd.s32 %s16, 1
      %s24 = ssub.s32 %s16, %s23
      %p25 = scmp.eq.s32.totalorder %s24, 0
      %s27 = sadd.s32 %s26, 1
      %s28 = scalar_select %p25, %s26, %s27
      %p31 = pneg %p25
      %p32 = scmp.eq.s32.totalorder %s16, 1
      %p33 = por %p31, %p32
      %p34 = scmp.ne.s32.totalorder %s26, %s29
      %p35 = scmp.eq.s32.totalorder %s16, 0
      %p36 = por %p34, %p35
      %p37 = scmp.ne.s32.totalorder %s26, %s29
      %p38 = scmp.eq.s32.totalorder %s21, 1
      %p39 = por %p37, %p38
      %p40 = scmp.ne.s32.totalorder %s29, %s30
      %p41 = scmp.eq.s32.totalorder %s21, 0
      %p42 = por %p40, %p41
      %p43 = scmp.ne.s32.totalorder %s29, %s30
      %p44 = scmp.eq.s32.totalorder %s22, 1
      %p45 = por %p43, %p44
      %p47 = scmp.ne.s32.totalorder %s30, %s46
      %p48 = scmp.eq.s32.totalorder %s22, 0
      %p49 = por %p47, %p48
      %s50 = ssub.s32 %s16, %s23
      %p51 = scmp.eq.s32.totalorder %s50, 0
      %s53 = sadd.s32 %s52, 1
      %s54 = scalar_select %p51, %s52, %s53
      %p57 = pneg %p51
      %p58 = scmp.eq.s32.totalorder %s16, 1
      %p59 = por %p57, %p58
      %p60 = scmp.ne.s32.totalorder %s52, %s55
      %p61 = scmp.eq.s32.totalorder %s16, 0
      %p62 = por %p60, %p61
      %p63 = scmp.ne.s32.totalorder %s52, %s55
      %p64 = scmp.eq.s32.totalorder %s21, 1
      %p65 = por %p63, %p64
      %p66 = scmp.ne.s32.totalorder %s55, %s56
      %p67 = scmp.eq.s32.totalorder %s21, 0
      %p68 = por %p66, %p67
      %p69 = scmp.ne.s32.totalorder %s55, %s56
      %p70 = scmp.eq.s32.totalorder %s22, 1
      %p71 = por %p69, %p70
      %p73 = scmp.ne.s32.totalorder %s56, %s72
      %p74 = scmp.eq.s32.totalorder %s22, 0
      %p75 = por %p73, %p74
      %s76 = ssub.s32 %s16, %s23
      %p77 = scmp.eq.s32.totalorder %s76, 0
      %s79 = sadd.s32 %s78, 1
      %s80 = scalar_select %p77, %s78, %s79
      %p83 = pneg %p77
      %p84 = scmp.eq.s32.totalorder %s16, 1
      %p85 = por %p83, %p84
      %p86 = scmp.ne.s32.totalorder %s78, %s81
      %p87 = scmp.eq.s32.totalorder %s16, 0
      %p88 = por %p86, %p87
      %p89 = scmp.ne.s32.totalorder %s78, %s81
      %p90 = scmp.eq.s32.totalorder %s21, 1
      %p91 = por %p89, %p90
      %p92 = scmp.ne.s32.totalorder %s81, %s82
      %p93 = scmp.eq.s32.totalorder %s21, 0
      %p94 = por %p92, %p93
      %p95 = scmp.ne.s32.totalorder %s81, %s82
      %p96 = scmp.eq.s32.totalorder %s22, 1
      %p97 = por %p95, %p96
      %p99 = scmp.ne.s32.totalorder %s82, %s98
      %p100 = scmp.eq.s32.totalorder %s22, 0
      %p101 = por %p99, %p100
      %s102 = ssub.s32 %s16, %s23
      %p103 = scmp.eq.s32.totalorder %s102, 0
      %s105 = sadd.s32 %s104, 1
      %s106 = scalar_select %p103, %s104, %s105
      %p109 = pneg %p103
      %p110 = scmp.eq.s32.totalorder %s16, 1
      %p111 = por %p109, %p110
      %p112 = scmp.ne.s32.totalorder %s104, %s107
      %p113 = scmp.eq.s32.totalorder %s16, 0
      %p114 = por %p112, %p113
      %p115 = scmp.ne.s32.totalorder %s104, %s107
      %p116 = scmp.eq.s32.totalorder %s21, 1
      %p117 = por %p115, %p116
      %p118 = scmp.ne.s32.totalorder %s107, %s108
      %p119 = scmp.eq.s32.totalorder %s21, 0
      %p120 = por %p118, %p119
      %p121 = scmp.ne.s32.totalorder %s107, %s108
      %p122 = scmp.eq.s32.totalorder %s22, 1
      %p123 = por %p121, %p122
      %p125 = scmp.ne.s32.totalorder %s108, %s124
      %p126 = scmp.eq.s32.totalorder %s22, 0
      %p127 = por %p125, %p126
      %p128 = scmp.le.s32.totalorder 1, %s16
      %p129 = scmp.lt.s32.totalorder %s16, 3
      %p130 = pnand %p128, %p129
      %p131 = pneg %p130
      // Predicated region
      $region9: #{tpu_custom_call.1} parent=5 // pred_check
        _
      $region10: #{tpu_custom_call.1} parent=5 // pred_check_branch
        %133 = sbr.rel (%p130) target = $region12
      $region11: #{tpu_custom_call.1} parent=5 // pred_region
        %s134 = ssub.s32 %s16, 1
      $region12: #{tpu_custom_call.1} parent=5 // pred_fallthru
        _
      %p135 = scmp.lt.s32.totalorder %s16, 2
      // Predicated region
      $region13: #{tpu_custom_call.1} parent=5 // pred_check
        %p136 = pneg %p135
      $region14: #{tpu_custom_call.1} parent=5 // pred_check_branch
        %138 = sbr.rel (%p136) target = $region16
      $region15: #{tpu_custom_call.1} parent=5 // pred_region
        // Predicated region
        $region17: #{tpu_custom_call.1} parent=15 // pred_check
          %p139 = pneg %p36
        $region18: #{tpu_custom_call.1} parent=15 // pred_check_branch
          %141 = sbr.rel (%p139) target = $region20
        $region19: #{tpu_custom_call.1} parent=15 // pred_region
          %s142 = smul.u32 2, %s16
          %p143 = scmp.lt.s32.totalorder %s142, 3
          %s144 = scalar_select %p143, %s142, 3
          %s145 = smul.addr %s144, 4
          %s146 = scalar_lea.vmem %s0, %s145
          %s147 = smul.u32 2, %s16
        $region20: #{tpu_custom_call.1} parent=15 // pred_fallthru
          _
        // Predicated region
        $region21: #{tpu_custom_call.1} parent=15 // pred_check
          %p148 = pneg %p62
        $region22: #{tpu_custom_call.1} parent=15 // pred_check_branch
          %150 = sbr.rel (%p148) target = $region24
        $region23: #{tpu_custom_call.1} parent=15 // pred_region
          %s151 = smul.u32 2, %s16
          %p152 = scmp.lt.s32.totalorder %s151, 3
          %s153 = scalar_select %p152, %s151, 3
          %s154 = smul.addr %s153, 16
          %s155 = smul.addr %s154, 8
          %s156 = scalar_lea.vmem %s1, %s155
          %s157 = smul.u32 2, %s16
        $region24: #{tpu_custom_call.1} parent=15 // pred_fallthru
          _
      $region16: #{tpu_custom_call.1} parent=5 // pred_fallthru
        _
      %p158 = scmp.le.s32.totalorder 1, %s16
      %p159 = scmp.lt.s32.totalorder %s16, 3
      %p160 = pnand %p158, %p159
      %p161 = pneg %p160
      // Predicated region
      $region25: #{tpu_custom_call.1} parent=5 // pred_check
        _
      $region26: #{tpu_custom_call.1} parent=5 // pred_check_branch
        %163 = sbr.rel (%p160) target = $region28
      $region27: #{tpu_custom_call.1} parent=5 // pred_region
        %s164 = ssub.s32 %s16, 1
        %s165 = smul.u32 2, %s21
        %p166 = scmp.lt.s32.totalorder %s165, 3
        %s167 = scalar_select %p166, %s165, 3
        %s168 = smul.addr %s167, 4
        %s169 = scalar_lea.vmem %s0, %s168
        %p170 = pneg %p42
        %p171 = pneg %p39
        %s172 = smul.u32 2, %s21
        %p173 = scmp.lt.s32.totalorder %s172, 3
        %s174 = scalar_select %p173, %s172, 3
        %s175 = smul.addr %s174, 16
        %s176 = smul.addr %s175, 8
        %s177 = scalar_lea.vmem %s1, %s176
        %p178 = pneg %p68
        %p179 = pneg %p65
        %p180 = pneg %p94
        %p181 = pneg %p91
        %s182 = sand.u32 %s81, 1
        %s183 = scalar_lea.sflag [#allocation5], %s182
        %s184 = sand.u32 %s81, 1
        %s185 = smul.addr %s184, 2
        %s186 = scalar_lea.vmem [#allocation4], %s185
        %p187 = pneg %p120
        %p188 = pneg %p117
        %s189 = sand.u32 %s107, 1
        %s190 = scalar_lea.sflag [#allocation7], %s189
        %s191 = sand.u32 %s107, 1
        %s192 = smul.addr %s191, 2
        %s193 = scalar_lea.vmem [#allocation6], %s192
        %s194 = smul.u32 2, %s21
        %p195 = scmp.lt.s32.totalorder %s194, 3
        %s196 = scalar_select %p195, %s194, 3
        %s197 = smul.addr %s196, 4
        %s198 = scalar_lea.vmem %s0, %s197
        %s199 = smul.u32 2, %s21
        %s200 = smul.u32 2, %s21
        %p201 = scmp.lt.s32.totalorder %s200, 3
        %s202 = scalar_select %p201, %s200, 3
        %s203 = smul.addr %s202, 16
        %s204 = smul.addr %s203, 8
        %s205 = scalar_lea.vmem %s1, %s204
        %s206 = smul.u32 2, %s21
        %s207 = smul.u32 2, %s21
        %s208 = smul.u32 2, %s21
        %v209 = vlaneseq
        %v210 = vshrl.u32 %v209, 7
        %v211 = vadd.s32 %v210, 8
        %v212 = vadd.s32 %v210, 16
        %v213 = vadd.s32 %v210, 24
        %v214 = vadd.s32 %v210, 32
        %v215 = vadd.s32 %v210, 40
        %v216 = vadd.s32 %v210, 48
        %v217 = vadd.s32 %v210, 56
        %v218 = vadd.s32 %v210, 64
        %v219 = vadd.s32 %v210, 72
        %v220 = vadd.s32 %v210, 80
        %v221 = vadd.s32 %v210, 88
        %v222 = vadd.s32 %v210, 96
        %v223 = vadd.s32 %v210, 104
        %v224 = vadd.s32 %v210, 112
        %v225 = vadd.s32 %v210, 120
        %v226 = vlaneseq
        %v227 = vand.u32 %v226, 127
        %v228 = vld [vmem:[%s198] sm:$0x7]
        %v229 = vld [vmem:[%s205] sm:$0xff]
        %v230 = vld [vmem:[%s205 + $0x8] sm:$0xff]
        %v231 = vld [vmem:[%s205 + $0x10] sm:$0xff]
        %v232 = vld [vmem:[%s205 + $0x18] sm:$0xff]
        %v233 = vld [vmem:[%s205 + $0x20] sm:$0xff]
        %v234 = vld [vmem:[%s205 + $0x28] sm:$0xff]
        %v235 = vld [vmem:[%s205 + $0x30] sm:$0xff]
        %v236 = vld [vmem:[%s205 + $0x38] sm:$0xff]
        %v237 = vld [vmem:[%s205 + $0x40] sm:$0xff]
        %v238 = vld [vmem:[%s205 + $0x48] sm:$0xff]
        %v239 = vld [vmem:[%s205 + $0x50] sm:$0xff]
        %v240 = vld [vmem:[%s205 + $0x58] sm:$0xff]
        %v241 = vld [vmem:[%s205 + $0x60] sm:$0xff]
        %v242 = vld [vmem:[%s205 + $0x68] sm:$0xff]
        %v243 = vld [vmem:[%s205 + $0x70] sm:$0xff]
        %v244 = vld [vmem:[%s205 + $0x78] sm:$0xff]
        %246 = vset.pattern.permute.xlu0 0
        %247 = vperm.xlu0 %246, %v229
        %v248 = vpop.permute.xlu0 %247
        %251 = vset.pattern.permute.xlu0 0
        %252 = vperm.xlu0 %251, %v230
        %v253 = vpop.permute.xlu0 %252
        %256 = vset.pattern.permute.xlu0 0
        %257 = vperm.xlu0 %256, %v231
        %v258 = vpop.permute.xlu0 %257
        %261 = vset.pattern.permute.xlu0 0
        %262 = vperm.xlu0 %261, %v232
        %v263 = vpop.permute.xlu0 %262
        %266 = vset.pattern.permute.xlu0 0
        %267 = vperm.xlu0 %266, %v233
        %v268 = vpop.permute.xlu0 %267
        %271 = vset.pattern.permute.xlu0 0
        %272 = vperm.xlu0 %271, %v234
        %v273 = vpop.permute.xlu0 %272
        %276 = vset.pattern.permute.xlu0 0
        %277 = vperm.xlu0 %276, %v235
        %v278 = vpop.permute.xlu0 %277
        %281 = vset.pattern.permute.xlu0 0
        %282 = vperm.xlu0 %281, %v236
        %v283 = vpop.permute.xlu0 %282
        %286 = vset.pattern.permute.xlu0 0
        %287 = vperm.xlu0 %286, %v237
        %v288 = vpop.permute.xlu0 %287
        %291 = vset.pattern.permute.xlu0 0
        %292 = vperm.xlu0 %291, %v238
        %v293 = vpop.permute.xlu0 %292
        %296 = vset.pattern.permute.xlu0 0
        %297 = vperm.xlu0 %296, %v239
        %v298 = vpop.permute.xlu0 %297
        %301 = vset.pattern.permute.xlu0 0
        %302 = vperm.xlu0 %301, %v240
        %v303 = vpop.permute.xlu0 %302
        %306 = vset.pattern.permute.xlu0 0
        %307 = vperm.xlu0 %306, %v241
        %v308 = vpop.permute.xlu0 %307
        %311 = vset.pattern.permute.xlu0 0
        %312 = vperm.xlu0 %311, %v242
        %v313 = vpop.permute.xlu0 %312
        %316 = vset.pattern.permute.xlu0 0
        %317 = vperm.xlu0 %316, %v243
        %v318 = vpop.permute.xlu0 %317
        %321 = vset.pattern.permute.xlu0 0
        %322 = vperm.xlu0 %321, %v244
        %v323 = vpop.permute.xlu0 %322
        %v325 = vlaneseq
        %v326 = vshrl.u32 %v325, 7
        %v327 = vsub.s32 0, %v326
        %v328 = vrot.slane %v228, %v327
        %v329 = vsub.f32 %v248, %v328
        %v330 = vsub.f32 %v253, %v328
        %v331 = vsub.f32 %v258, %v328
        %v332 = vsub.f32 %v263, %v328
        %v333 = vsub.f32 %v268, %v328
        %v334 = vsub.f32 %v273, %v328
        %v335 = vsub.f32 %v278, %v328
        %v336 = vsub.f32 %v283, %v328
        %v337 = vsub.f32 %v288, %v328
        %v338 = vsub.f32 %v293, %v328
        %v339 = vsub.f32 %v298, %v328
        %v340 = vsub.f32 %v303, %v328
        %v341 = vsub.f32 %v308, %v328
        %v342 = vsub.f32 %v313, %v328
        %v343 = vsub.f32 %v318, %v328
        %v344 = vsub.f32 %v323, %v328
        %v345 = vmul.f32 %v329, %v329
        %v346 = vmul.f32 %v330, %v330
        %v347 = vmul.f32 %v331, %v331
        %v348 = vmul.f32 %v332, %v332
        %v349 = vmul.f32 %v333, %v333
        %v350 = vmul.f32 %v334, %v334
        %v351 = vmul.f32 %v335, %v335
        %v352 = vmul.f32 %v336, %v336
        %v353 = vmul.f32 %v337, %v337
        %v354 = vmul.f32 %v338, %v338
        %v355 = vmul.f32 %v339, %v339
        %v356 = vmul.f32 %v340, %v340
        %v357 = vmul.f32 %v341, %v341
        %v358 = vmul.f32 %v342, %v342
        %v359 = vmul.f32 %v343, %v343
        %v360 = vmul.f32 %v344, %v344
        %361 = vset.pattern.permute.xlu0 1
        %362 = vperm.xlu0 %361, %v229
        %v363 = vpop.permute.xlu0 %362
        %365 = vset.pattern.permute.xlu0 1
        %366 = vperm.xlu0 %365, %v230
        %v367 = vpop.permute.xlu0 %366
        %369 = vset.pattern.permute.xlu0 1
        %370 = vperm.xlu0 %369, %v231
        %v371 = vpop.permute.xlu0 %370
        %373 = vset.pattern.permute.xlu0 1
        %374 = vperm.xlu0 %373, %v232
        %v375 = vpop.permute.xlu0 %374
        %377 = vset.pattern.permute.xlu0 1
        %378 = vperm.xlu0 %377, %v233
        %v379 = vpop.permute.xlu0 %378
        %381 = vset.pattern.permute.xlu0 1
        %382 = vperm.xlu0 %381, %v234
        %v383 = vpop.permute.xlu0 %382
        %385 = vset.pattern.permute.xlu0 1
        %386 = vperm.xlu0 %385, %v235
        %v387 = vpop.permute.xlu0 %386
        %389 = vset.pattern.permute.xlu0 1
        %390 = vperm.xlu0 %389, %v236
        %v391 = vpop.permute.xlu0 %390
        %393 = vset.pattern.permute.xlu0 1
        %394 = vperm.xlu0 %393, %v237
        %v395 = vpop.permute.xlu0 %394
        %397 = vset.pattern.permute.xlu0 1
        %398 = vperm.xlu0 %397, %v238
        %v399 = vpop.permute.xlu0 %398
        %401 = vset.pattern.permute.xlu0 1
        %402 = vperm.xlu0 %401, %v239
        %v403 = vpop.permute.xlu0 %402
        %405 = vset.pattern.permute.xlu0 1
        %406 = vperm.xlu0 %405, %v240
        %v407 = vpop.permute.xlu0 %406
        %409 = vset.pattern.permute.xlu0 1
        %410 = vperm.xlu0 %409, %v241
        %v411 = vpop.permute.xlu0 %410
        %413 = vset.pattern.permute.xlu0 1
        %414 = vperm.xlu0 %413, %v242
        %v415 = vpop.permute.xlu0 %414
        %417 = vset.pattern.permute.xlu0 1
        %418 = vperm.xlu0 %417, %v243
        %v419 = vpop.permute.xlu0 %418
        %421 = vset.pattern.permute.xlu0 1
        %422 = vperm.xlu0 %421, %v244
        %v423 = vpop.permute.xlu0 %422
        %v425 = vlaneseq
        %v426 = vshrl.u32 %v425, 7
        %v427 = vsub.s32 1, %v426
        %v428 = vrot.slane %v228, %v427
        %v429 = vsub.f32 %v363, %v428
        %v430 = vsub.f32 %v367, %v428
        %v431 = vsub.f32 %v371, %v428
        %v432 = vsub.f32 %v375, %v428
        %v433 = vsub.f32 %v379, %v428
        %v434 = vsub.f32 %v383, %v428
        %v435 = vsub.f32 %v387, %v428
        %v436 = vsub.f32 %v391, %v428
        %v437 = vsub.f32 %v395, %v428
        %v438 = vsub.f32 %v399, %v428
        %v439 = vsub.f32 %v403, %v428
        %v440 = vsub.f32 %v407, %v428
        %v441 = vsub.f32 %v411, %v428
        %v442 = vsub.f32 %v415, %v428
        %v443 = vsub.f32 %v419, %v428
        %v444 = vsub.f32 %v423, %v428
        %v445 = vmul.f32 %v429, %v429
        %v446 = vmul.f32 %v430, %v430
        %v447 = vmul.f32 %v431, %v431
        %v448 = vmul.f32 %v432, %v432
        %v449 = vmul.f32 %v433, %v433
        %v450 = vmul.f32 %v434, %v434
        %v451 = vmul.f32 %v435, %v435
        %v452 = vmul.f32 %v436, %v436
        %v453 = vmul.f32 %v437, %v437
        %v454 = vmul.f32 %v438, %v438
        %v455 = vmul.f32 %v439, %v439
        %v456 = vmul.f32 %v440, %v440
        %v457 = vmul.f32 %v441, %v441
        %v458 = vmul.f32 %v442, %v442
        %v459 = vmul.f32 %v443, %v443
        %v460 = vmul.f32 %v444, %v444
        %v461 = vadd.f32 %v345, %v445
        %v462 = vadd.f32 %v346, %v446
        %v463 = vadd.f32 %v347, %v447
        %v464 = vadd.f32 %v348, %v448
        %v465 = vadd.f32 %v349, %v449
        %v466 = vadd.f32 %v350, %v450
        %v467 = vadd.f32 %v351, %v451
        %v468 = vadd.f32 %v352, %v452
        %v469 = vadd.f32 %v353, %v453
        %v470 = vadd.f32 %v354, %v454
        %v471 = vadd.f32 %v355, %v455
        %v472 = vadd.f32 %v356, %v456
        %v473 = vadd.f32 %v357, %v457
        %v474 = vadd.f32 %v358, %v458
        %v475 = vadd.f32 %v359, %v459
        %v476 = vadd.f32 %v360, %v460
        %477 = vset.pattern.permute.xlu0 2
        %478 = vperm.xlu0 %477, %v229
        %v479 = vpop.permute.xlu0 %478
        %481 = vset.pattern.permute.xlu0 2
        %482 = vperm.xlu0 %481, %v230
        %v483 = vpop.permute.xlu0 %482
        %485 = vset.pattern.permute.xlu0 2
        %486 = vperm.xlu0 %485, %v231
        %v487 = vpop.permute.xlu0 %486
        %489 = vset.pattern.permute.xlu0 2
        %490 = vperm.xlu0 %489, %v232
        %v491 = vpop.permute.xlu0 %490
        %493 = vset.pattern.permute.xlu0 2
        %494 = vperm.xlu0 %493, %v233
        %v495 = vpop.permute.xlu0 %494
        %497 = vset.pattern.permute.xlu0 2
        %498 = vperm.xlu0 %497, %v234
        %v499 = vpop.permute.xlu0 %498
        %501 = vset.pattern.permute.xlu0 2
        %502 = vperm.xlu0 %501, %v235
        %v503 = vpop.permute.xlu0 %502
        %505 = vset.pattern.permute.xlu0 2
        %506 = vperm.xlu0 %505, %v236
        %v507 = vpop.permute.xlu0 %506
        %509 = vset.pattern.permute.xlu0 2
        %510 = vperm.xlu0 %509, %v237
        %v511 = vpop.permute.xlu0 %510
        %513 = vset.pattern.permute.xlu0 2
        %514 = vperm.xlu0 %513, %v238
        %v515 = vpop.permute.xlu0 %514
        %517 = vset.pattern.permute.xlu0 2
        %518 = vperm.xlu0 %517, %v239
        %v519 = vpop.permute.xlu0 %518
        %521 = vset.pattern.permute.xlu0 2
        %522 = vperm.xlu0 %521, %v240
        %v523 = vpop.permute.xlu0 %522
        %525 = vset.pattern.permute.xlu0 2
        %526 = vperm.xlu0 %525, %v241
        %v527 = vpop.permute.xlu0 %526
        %529 = vset.pattern.permute.xlu0 2
        %530 = vperm.xlu0 %529, %v242
        %v531 = vpop.permute.xlu0 %530
        %533 = vset.pattern.permute.xlu0 2
        %534 = vperm.xlu0 %533, %v243
        %v535 = vpop.permute.xlu0 %534
        %537 = vset.pattern.permute.xlu0 2
        %538 = vperm.xlu0 %537, %v244
        %v539 = vpop.permute.xlu0 %538
        %v541 = vlaneseq
        %v542 = vshrl.u32 %v541, 7
        %v543 = vsub.s32 2, %v542
        %v544 = vrot.slane %v228, %v543
        %v545 = vsub.f32 %v479, %v544
        %v546 = vsub.f32 %v483, %v544
        %v547 = vsub.f32 %v487, %v544
        %v548 = vsub.f32 %v491, %v544
        %v549 = vsub.f32 %v495, %v544
        %v550 = vsub.f32 %v499, %v544
        %v551 = vsub.f32 %v503, %v544
        %v552 = vsub.f32 %v507, %v544
        %v553 = vsub.f32 %v511, %v544
        %v554 = vsub.f32 %v515, %v544
        %v555 = vsub.f32 %v519, %v544
        %v556 = vsub.f32 %v523, %v544
        %v557 = vsub.f32 %v527, %v544
        %v558 = vsub.f32 %v531, %v544
        %v559 = vsub.f32 %v535, %v544
        %v560 = vsub.f32 %v539, %v544
        %v561 = vmul.f32 %v545, %v545
        %v562 = vmul.f32 %v546, %v546
        %v563 = vmul.f32 %v547, %v547
        %v564 = vmul.f32 %v548, %v548
        %v565 = vmul.f32 %v549, %v549
        %v566 = vmul.f32 %v550, %v550
        %v567 = vmul.f32 %v551, %v551
        %v568 = vmul.f32 %v552, %v552
        %v569 = vmul.f32 %v553, %v553
        %v570 = vmul.f32 %v554, %v554
        %v571 = vmul.f32 %v555, %v555
        %v572 = vmul.f32 %v556, %v556
        %v573 = vmul.f32 %v557, %v557
        %v574 = vmul.f32 %v558, %v558
        %v575 = vmul.f32 %v559, %v559
        %v576 = vmul.f32 %v560, %v560
        %v577 = vadd.f32 %v461, %v561
        %v578 = vadd.f32 %v462, %v562
        %v579 = vadd.f32 %v463, %v563
        %v580 = vadd.f32 %v464, %v564
        %v581 = vadd.f32 %v465, %v565
        %v582 = vadd.f32 %v466, %v566
        %v583 = vadd.f32 %v467, %v567
        %v584 = vadd.f32 %v468, %v568
        %v585 = vadd.f32 %v469, %v569
        %v586 = vadd.f32 %v470, %v570
        %v587 = vadd.f32 %v471, %v571
        %v588 = vadd.f32 %v472, %v572
        %v589 = vadd.f32 %v473, %v573
        %v590 = vadd.f32 %v474, %v574
        %v591 = vadd.f32 %v475, %v575
        %v592 = vadd.f32 %v476, %v576
        %v609 = vand.u32 %v577, 4294967168
        %v610 = vand.u32 %v578, 4294967168
        %v611 = vand.u32 %v579, 4294967168
        %v612 = vand.u32 %v580, 4294967168
        %v613 = vand.u32 %v581, 4294967168
        %v614 = vand.u32 %v582, 4294967168
        %v615 = vand.u32 %v583, 4294967168
        %v616 = vand.u32 %v584, 4294967168
        %v617 = vand.u32 %v585, 4294967168
        %v618 = vand.u32 %v586, 4294967168
        %v619 = vand.u32 %v587, 4294967168
        %v620 = vand.u32 %v588, 4294967168
        %v621 = vand.u32 %v589, 4294967168
        %v622 = vand.u32 %v590, 4294967168
        %v623 = vand.u32 %v591, 4294967168
        %v624 = vand.u32 %v592, 4294967168
        %v625 = vor.u32 %v609, %v210
        %v626 = vor.u32 %v610, %v211
        %v627 = vor.u32 %v611, %v212
        %v628 = vor.u32 %v612, %v213
        %v629 = vor.u32 %v613, %v214
        %v630 = vor.u32 %v614, %v215
        %v631 = vor.u32 %v615, %v216
        %v632 = vor.u32 %v616, %v217
        %v633 = vor.u32 %v617, %v218
        %v634 = vor.u32 %v618, %v219
        %v635 = vor.u32 %v619, %v220
        %v636 = vor.u32 %v620, %v221
        %v637 = vor.u32 %v621, %v222
        %v638 = vor.u32 %v622, %v223
        %v639 = vor.u32 %v623, %v224
        %v640 = vor.u32 %v624, %v225
        %641 = vst [vmem:[#allocation2] sm:$0xff] %v625
        %642 = vst [vmem:[#allocation2 + $0x8] sm:$0xff] %v626
        %643 = vst [vmem:[#allocation2 + $0x10] sm:$0xff] %v627
        %644 = vst [vmem:[#allocation2 + $0x18] sm:$0xff] %v628
        %645 = vst [vmem:[#allocation2 + $0x20] sm:$0xff] %v629
        %646 = vst [vmem:[#allocation2 + $0x28] sm:$0xff] %v630
        %647 = vst [vmem:[#allocation2 + $0x30] sm:$0xff] %v631
        %648 = vst [vmem:[#allocation2 + $0x38] sm:$0xff] %v632
        %649 = vst [vmem:[#allocation2 + $0x40] sm:$0xff] %v633
        %650 = vst [vmem:[#allocation2 + $0x48] sm:$0xff] %v634
        %651 = vst [vmem:[#allocation2 + $0x50] sm:$0xff] %v635
        %652 = vst [vmem:[#allocation2 + $0x58] sm:$0xff] %v636
        %653 = vst [vmem:[#allocation2 + $0x60] sm:$0xff] %v637
        %654 = vst [vmem:[#allocation2 + $0x68] sm:$0xff] %v638
        %655 = vst [vmem:[#allocation2 + $0x70] sm:$0xff] %v639
        %656 = vst [vmem:[#allocation2 + $0x78] sm:$0xff] %v640
        %vm657 = vcmask 7168
        %658 = vst.msk [vmem:[#allocation3] sm:$0xff] %vm657, 4294967295
        %659 = vst.msk [vmem:[#allocation3 + $0x8] sm:$0xff] %vm657, 4294967295
        %660 = vst.msk [vmem:[#allocation3 + $0x10] sm:$0xff] %vm657, 4294967295
        %661 = vst.msk [vmem:[#allocation3 + $0x18] sm:$0xff] %vm657, 4294967295
        %662 = vst.msk [vmem:[#allocation3 + $0x20] sm:$0xff] %vm657, 4294967295
        %663 = vst.msk [vmem:[#allocation3 + $0x28] sm:$0xff] %vm657, 4294967295
        %664 = vst.msk [vmem:[#allocation3 + $0x30] sm:$0xff] %vm657, 4294967295
        %665 = vst.msk [vmem:[#allocation3 + $0x38] sm:$0xff] %vm657, 4294967295
        %666 = vst.msk [vmem:[#allocation3 + $0x40] sm:$0xff] %vm657, 4294967295
        %667 = vst.msk [vmem:[#allocation3 + $0x48] sm:$0xff] %vm657, 4294967295
        %668 = vst.msk [vmem:[#allocation3 + $0x50] sm:$0xff] %vm657, 4294967295
        %669 = vst.msk [vmem:[#allocation3 + $0x58] sm:$0xff] %vm657, 4294967295
        %670 = vst.msk [vmem:[#allocation3 + $0x60] sm:$0xff] %vm657, 4294967295
        %671 = vst.msk [vmem:[#allocation3 + $0x68] sm:$0xff] %vm657, 4294967295
        %672 = vst.msk [vmem:[#allocation3 + $0x70] sm:$0xff] %vm657, 4294967295
        %673 = vst.msk [vmem:[#allocation3 + $0x78] sm:$0xff] %vm657, 4294967295
        loop: start=0, step=1, limit=32
        $region29: #{tpu_custom_call.1} parent=27 // loop_pre_header
          _
        $region30: #{tpu_custom_call.1} parent=27 // loop_header
          %s675 = sphi 0, %s679
          %p676 = scmp.ge.s32.totalorder %s675, 32
        $region31: #{tpu_custom_call.1} parent=27 // loop_header_branch
          %678 = sbr.rel (%p676) target = $region35
        $region32: #{tpu_custom_call.1} parent=27 // loop_body
          %v680 = vld [vmem:[#allocation2] sm:$0xff]
          %v681 = vld [vmem:[#allocation2 + $0x8] sm:$0xff]
          %v682 = vld [vmem:[#allocation2 + $0x10] sm:$0xff]
          %v683 = vld [vmem:[#allocation2 + $0x18] sm:$0xff]
          %v684 = vld [vmem:[#allocation2 + $0x20] sm:$0xff]
          %v685 = vld [vmem:[#allocation2 + $0x28] sm:$0xff]
          %v686 = vld [vmem:[#allocation2 + $0x30] sm:$0xff]
          %v687 = vld [vmem:[#allocation2 + $0x38] sm:$0xff]
          %v688 = vld [vmem:[#allocation2 + $0x40] sm:$0xff]
          %v689 = vld [vmem:[#allocation2 + $0x48] sm:$0xff]
          %v690 = vld [vmem:[#allocation2 + $0x50] sm:$0xff]
          %v691 = vld [vmem:[#allocation2 + $0x58] sm:$0xff]
          %v692 = vld [vmem:[#allocation2 + $0x60] sm:$0xff]
          %v693 = vld [vmem:[#allocation2 + $0x68] sm:$0xff]
          %v694 = vld [vmem:[#allocation2 + $0x70] sm:$0xff]
          %v695 = vld [vmem:[#allocation2 + $0x78] sm:$0xff]
          %v696 = vld [vmem:[#allocation3] sm:$0xff]
          %v697 = vld [vmem:[#allocation3 + $0x8] sm:$0xff]
          %v698 = vld [vmem:[#allocation3 + $0x10] sm:$0xff]
          %v699 = vld [vmem:[#allocation3 + $0x18] sm:$0xff]
          %v700 = vld [vmem:[#allocation3 + $0x20] sm:$0xff]
          %v701 = vld [vmem:[#allocation3 + $0x28] sm:$0xff]
          %v702 = vld [vmem:[#allocation3 + $0x30] sm:$0xff]
          %v703 = vld [vmem:[#allocation3 + $0x38] sm:$0xff]
          %v704 = vld [vmem:[#allocation3 + $0x40] sm:$0xff]
          %v705 = vld [vmem:[#allocation3 + $0x48] sm:$0xff]
          %v706 = vld [vmem:[#allocation3 + $0x50] sm:$0xff]
          %v707 = vld [vmem:[#allocation3 + $0x58] sm:$0xff]
          %v708 = vld [vmem:[#allocation3 + $0x60] sm:$0xff]
          %v709 = vld [vmem:[#allocation3 + $0x68] sm:$0xff]
          %v710 = vld [vmem:[#allocation3 + $0x70] sm:$0xff]
          %v711 = vld [vmem:[#allocation3 + $0x78] sm:$0xff]
          %712 = vset.pattern.permute.xlu0 0
          %713 = vperm.xlu0 %712, %v696
          %v714 = vpop.permute.xlu0 %713
          %715 = vset.pattern.permute.xlu0 0
          %716 = vperm.xlu0 %715, %v697
          %v717 = vpop.permute.xlu0 %716
          %718 = vset.pattern.permute.xlu0 0
          %719 = vperm.xlu0 %718, %v698
          %v720 = vpop.permute.xlu0 %719
          %721 = vset.pattern.permute.xlu0 0
          %722 = vperm.xlu0 %721, %v699
          %v723 = vpop.permute.xlu0 %722
          %724 = vset.pattern.permute.xlu0 0
          %725 = vperm.xlu0 %724, %v700
          %v726 = vpop.permute.xlu0 %725
          %727 = vset.pattern.permute.xlu0 0
          %728 = vperm.xlu0 %727, %v701
          %v729 = vpop.permute.xlu0 %728
          %730 = vset.pattern.permute.xlu0 0
          %731 = vperm.xlu0 %730, %v702
          %v732 = vpop.permute.xlu0 %731
          %733 = vset.pattern.permute.xlu0 0
          %734 = vperm.xlu0 %733, %v703
          %v735 = vpop.permute.xlu0 %734
          %736 = vset.pattern.permute.xlu0 0
          %737 = vperm.xlu0 %736, %v704
          %v738 = vpop.permute.xlu0 %737
          %739 = vset.pattern.permute.xlu0 0
          %740 = vperm.xlu0 %739, %v705
          %v741 = vpop.permute.xlu0 %740
          %742 = vset.pattern.permute.xlu0 0
          %743 = vperm.xlu0 %742, %v706
          %v744 = vpop.permute.xlu0 %743
          %745 = vset.pattern.permute.xlu0 0
          %746 = vperm.xlu0 %745, %v707
          %v747 = vpop.permute.xlu0 %746
          %748 = vset.pattern.permute.xlu0 0
          %749 = vperm.xlu0 %748, %v708
          %v750 = vpop.permute.xlu0 %749
          %751 = vset.pattern.permute.xlu0 0
          %752 = vperm.xlu0 %751, %v709
          %v753 = vpop.permute.xlu0 %752
          %754 = vset.pattern.permute.xlu0 0
          %755 = vperm.xlu0 %754, %v710
          %v756 = vpop.permute.xlu0 %755
          %757 = vset.pattern.permute.xlu0 0
          %758 = vperm.xlu0 %757, %v711
          %v759 = vpop.permute.xlu0 %758
          %vm760 = vcmp.eq.s32.totalorder %v714, %v227
          %vm761 = vcmp.eq.s32.totalorder %v717, %v227
          %vm762 = vcmp.eq.s32.totalorder %v720, %v227
          %vm763 = vcmp.eq.s32.totalorder %v723, %v227
          %vm764 = vcmp.eq.s32.totalorder %v726, %v227
          %vm765 = vcmp.eq.s32.totalorder %v729, %v227
          %vm766 = vcmp.eq.s32.totalorder %v732, %v227
          %vm767 = vcmp.eq.s32.totalorder %v735, %v227
          %vm768 = vcmp.eq.s32.totalorder %v738, %v227
          %vm769 = vcmp.eq.s32.totalorder %v741, %v227
          %vm770 = vcmp.eq.s32.totalorder %v744, %v227
          %vm771 = vcmp.eq.s32.totalorder %v747, %v227
          %vm772 = vcmp.eq.s32.totalorder %v750, %v227
          %vm773 = vcmp.eq.s32.totalorder %v753, %v227
          %vm774 = vcmp.eq.s32.totalorder %v756, %v227
          %vm775 = vcmp.eq.s32.totalorder %v759, %v227
          %v776 = vsel %vm760, 1.0, 0.0
          %v777 = vsel %vm761, 1.0, 0.0
          %v778 = vsel %vm762, 1.0, 0.0
          %v779 = vsel %vm763, 1.0, 0.0
          %v780 = vsel %vm764, 1.0, 0.0
          %v781 = vsel %vm765, 1.0, 0.0
          %v782 = vsel %vm766, 1.0, 0.0
          %v783 = vsel %vm767, 1.0, 0.0
          %v784 = vsel %vm768, 1.0, 0.0
          %v785 = vsel %vm769, 1.0, 0.0
          %v786 = vsel %vm770, 1.0, 0.0
          %v787 = vsel %vm771, 1.0, 0.0
          %v788 = vsel %vm772, 1.0, 0.0
          %v789 = vsel %vm773, 1.0, 0.0
          %v790 = vsel %vm774, 1.0, 0.0
          %v791 = vsel %vm775, 1.0, 0.0
          %v792 = vmax.f32 %v776, %v780
          %v793 = vmax.f32 %v777, %v781
          %v794 = vmax.f32 %v778, %v782
          %v795 = vmax.f32 %v779, %v783
          %v796 = vmax.f32 %v792, %v784
          %v797 = vmax.f32 %v793, %v785
          %v798 = vmax.f32 %v794, %v786
          %v799 = vmax.f32 %v795, %v787
          %v800 = vmax.f32 %v796, %v788
          %v801 = vmax.f32 %v797, %v789
          %v802 = vmax.f32 %v798, %v790
          %v803 = vmax.f32 %v799, %v791
          %v804 = vmax.f32 %v800, %v801
          %v805 = vmax.f32 %v802, %v803
          %v806 = vmax.f32 %v804, %v805
          %v807 = vrot.slane %v806, 4
          %v808 = vmax.f32 %v806, %v807
          %v809 = vrot.slane %v808, 2
          %v810 = vmax.f32 %v808, %v809
          %v811 = vrot.slane %v810, 1
          %v812 = vmax.f32 %v810, %v811
          %vm813 = vcmp.gt.f32.partialorder %v812, 0.0
          %vm814 = vcmp.lt.s32.totalorder %v680, %v684
          %v815 = vsel %vm814, %v680, %v684
          %vm816 = vcmp.lt.s32.totalorder %v681, %v685
          %v817 = vsel %vm816, %v681, %v685
          %vm818 = vcmp.lt.s32.totalorder %v682, %v686
          %v819 = vsel %vm818, %v682, %v686
          %vm820 = vcmp.lt.s32.totalorder %v683, %v687
          %v821 = vsel %vm820, %v683, %v687
          %vm822 = vcmp.lt.s32.totalorder %v815, %v688
          %v823 = vsel %vm822, %v815, %v688
          %vm824 = vcmp.lt.s32.totalorder %v817, %v689
          %v825 = vsel %vm824, %v817, %v689
          %vm826 = vcmp.lt.s32.totalorder %v819, %v690
          %v827 = vsel %vm826, %v819, %v690
          %vm828 = vcmp.lt.s32.totalorder %v821, %v691
          %v829 = vsel %vm828, %v821, %v691
          %vm830 = vcmp.lt.s32.totalorder %v823, %v692
          %v831 = vsel %vm830, %v823, %v692
          %vm832 = vcmp.lt.s32.totalorder %v825, %v693
          %v833 = vsel %vm832, %v825, %v693
          %vm834 = vcmp.lt.s32.totalorder %v827, %v694
          %v835 = vsel %vm834, %v827, %v694
          %vm836 = vcmp.lt.s32.totalorder %v829, %v695
          %v837 = vsel %vm836, %v829, %v695
          %vm838 = vcmp.lt.s32.totalorder %v831, %v833
          %v839 = vsel %vm838, %v831, %v833
          %vm840 = vcmp.lt.s32.totalorder %v835, %v837
          %v841 = vsel %vm840, %v835, %v837
          %vm842 = vcmp.lt.s32.totalorder %v839, %v841
          %v843 = vsel %vm842, %v839, %v841
          %v844 = vrot.slane %v843, 4
          %vm845 = vcmp.lt.s32.totalorder %v843, %v844
          %v846 = vsel %vm845, %v843, %v844
          %v847 = vrot.slane %v846, 2
          %vm848 = vcmp.lt.s32.totalorder %v846, %v847
          %v849 = vsel %vm848, %v846, %v847
          %v850 = vrot.slane %v849, 1
          %vm851 = vcmp.lt.s32.totalorder %v849, %v850
          %v852 = vsel %vm851, %v849, %v850
          %v853 = vand.u32 %v852, 4294967168
          %vm855 = vcmp.eq.s32.totalorder %v680, %v852
          %vm856 = vcmp.eq.s32.totalorder %v681, %v852
          %vm857 = vcmp.eq.s32.totalorder %v682, %v852
          %vm858 = vcmp.eq.s32.totalorder %v683, %v852
          %vm859 = vcmp.eq.s32.totalorder %v684, %v852
          %vm860 = vcmp.eq.s32.totalorder %v685, %v852
          %vm861 = vcmp.eq.s32.totalorder %v686, %v852
          %vm862 = vcmp.eq.s32.totalorder %v687, %v852
          %vm863 = vcmp.eq.s32.totalorder %v688, %v852
          %vm864 = vcmp.eq.s32.totalorder %v689, %v852
          %vm865 = vcmp.eq.s32.totalorder %v690, %v852
          %vm866 = vcmp.eq.s32.totalorder %v691, %v852
          %vm867 = vcmp.eq.s32.totalorder %v692, %v852
          %vm868 = vcmp.eq.s32.totalorder %v693, %v852
          %vm869 = vcmp.eq.s32.totalorder %v694, %v852
          %vm870 = vcmp.eq.s32.totalorder %v695, %v852
          %v871 = vsel %vm855, 2139095039, %v680
          %v872 = vsel %vm856, 2139095039, %v681
          %v873 = vsel %vm857, 2139095039, %v682
          %v874 = vsel %vm858, 2139095039, %v683
          %v875 = vsel %vm859, 2139095039, %v684
          %v876 = vsel %vm860, 2139095039, %v685
          %v877 = vsel %vm861, 2139095039, %v686
          %v878 = vsel %vm862, 2139095039, %v687
          %v879 = vsel %vm863, 2139095039, %v688
          %v880 = vsel %vm864, 2139095039, %v689
          %v881 = vsel %vm865, 2139095039, %v690
          %v882 = vsel %vm866, 2139095039, %v691
          %v883 = vsel %vm867, 2139095039, %v692
          %v884 = vsel %vm868, 2139095039, %v693
          %v885 = vsel %vm869, 2139095039, %v694
          %v886 = vsel %vm870, 2139095039, %v695
          %vm887 = vcmp.lt.s32.totalorder %v871, %v875
          %v888 = vsel %vm887, %v871, %v875
          %vm889 = vcmp.lt.s32.totalorder %v872, %v876
          %v890 = vsel %vm889, %v872, %v876
          %vm891 = vcmp.lt.s32.totalorder %v873, %v877
          %v892 = vsel %vm891, %v873, %v877
          %vm893 = vcmp.lt.s32.totalorder %v874, %v878
          %v894 = vsel %vm893, %v874, %v878
          %vm895 = vcmp.lt.s32.totalorder %v888, %v879
          %v896 = vsel %vm895, %v888, %v879
          %vm897 = vcmp.lt.s32.totalorder %v890, %v880
          %v898 = vsel %vm897, %v890, %v880
          %vm899 = vcmp.lt.s32.totalorder %v892, %v881
          %v900 = vsel %vm899, %v892, %v881
          %vm901 = vcmp.lt.s32.totalorder %v894, %v882
          %v902 = vsel %vm901, %v894, %v882
          %vm903 = vcmp.lt.s32.totalorder %v896, %v883
          %v904 = vsel %vm903, %v896, %v883
          %vm905 = vcmp.lt.s32.totalorder %v898, %v884
          %v906 = vsel %vm905, %v898, %v884
          %vm907 = vcmp.lt.s32.totalorder %v900, %v885
          %v908 = vsel %vm907, %v900, %v885
          %vm909 = vcmp.lt.s32.totalorder %v902, %v886
          %v910 = vsel %vm909, %v902, %v886
          %vm911 = vcmp.lt.s32.totalorder %v904, %v906
          %v912 = vsel %vm911, %v904, %v906
          %vm913 = vcmp.lt.s32.totalorder %v908, %v910
          %v914 = vsel %vm913, %v908, %v910
          %vm915 = vcmp.lt.s32.totalorder %v912, %v914
          %v916 = vsel %vm915, %v912, %v914
          %v917 = vrot.slane %v916, 4
          %vm918 = vcmp.lt.s32.totalorder %v916, %v917
          %v919 = vsel %vm918, %v916, %v917
          %v920 = vrot.slane %v919, 2
          %vm921 = vcmp.lt.s32.totalorder %v919, %v920
          %v922 = vsel %vm921, %v919, %v920
          %v923 = vrot.slane %v922, 1
          %vm924 = vcmp.lt.s32.totalorder %v922, %v923
          %v925 = vsel %vm924, %v922, %v923
          %v926 = vand.u32 %v925, 4294967168
          %v928 = vsub.f32 %v926, %v853
          %v929 = vadd.f32 %v928, 0.02
          %v931 = vand.u32 %v929, 4294967168
          %v932 = vor.u32 %v931, %v227
          %vm934 = vmxor %vm813, 1
          %v935 = vsel %vm934, 1, 0
          %vm936 = vcmp.eq.s32.totalorder %v935, 1
          %vm937 = vmand %vm855, %vm936
          %vm938 = vmand %vm856, %vm936
          %vm939 = vmand %vm857, %vm936
          %vm940 = vmand %vm858, %vm936
          %vm941 = vmand %vm859, %vm936
          %vm942 = vmand %vm860, %vm936
          %vm943 = vmand %vm861, %vm936
          %vm944 = vmand %vm862, %vm936
          %vm945 = vmand %vm863, %vm936
          %vm946 = vmand %vm864, %vm936
          %vm947 = vmand %vm865, %vm936
          %vm948 = vmand %vm866, %vm936
          %vm949 = vmand %vm867, %vm936
          %vm950 = vmand %vm868, %vm936
          %vm951 = vmand %vm869, %vm936
          %vm952 = vmand %vm870, %vm936
          %v953 = vsel %vm937, %v932, 0.0
          %v954 = vsel %vm938, %v932, 0.0
          %v955 = vsel %vm939, %v932, 0.0
          %v956 = vsel %vm940, %v932, 0.0
          %v957 = vsel %vm941, %v932, 0.0
          %v958 = vsel %vm942, %v932, 0.0
          %v959 = vsel %vm943, %v932, 0.0
          %v960 = vsel %vm944, %v932, 0.0
          %v961 = vsel %vm945, %v932, 0.0
          %v962 = vsel %vm946, %v932, 0.0
          %v963 = vsel %vm947, %v932, 0.0
          %v964 = vsel %vm948, %v932, 0.0
          %v965 = vsel %vm949, %v932, 0.0
          %v966 = vsel %vm950, %v932, 0.0
          %v967 = vsel %vm951, %v932, 0.0
          %v968 = vsel %vm952, %v932, 0.0
          %969 = vmax.xlane.f32.xlu0 %v953
          %v970 = vpop.xlane.xlu0 %969
          %971 = vmax.xlane.f32.xlu0 %v954
          %v972 = vpop.xlane.xlu0 %971
          %973 = vmax.xlane.f32.xlu0 %v955
          %v974 = vpop.xlane.xlu0 %973
          %975 = vmax.xlane.f32.xlu0 %v956
          %v976 = vpop.xlane.xlu0 %975
          %977 = vmax.xlane.f32.xlu0 %v957
          %v978 = vpop.xlane.xlu0 %977
          %979 = vmax.xlane.f32.xlu0 %v958
          %v980 = vpop.xlane.xlu0 %979
          %981 = vmax.xlane.f32.xlu0 %v959
          %v982 = vpop.xlane.xlu0 %981
          %983 = vmax.xlane.f32.xlu0 %v960
          %v984 = vpop.xlane.xlu0 %983
          %985 = vmax.xlane.f32.xlu0 %v961
          %v986 = vpop.xlane.xlu0 %985
          %987 = vmax.xlane.f32.xlu0 %v962
          %v988 = vpop.xlane.xlu0 %987
          %989 = vmax.xlane.f32.xlu0 %v963
          %v990 = vpop.xlane.xlu0 %989
          %991 = vmax.xlane.f32.xlu0 %v964
          %v992 = vpop.xlane.xlu0 %991
          %993 = vmax.xlane.f32.xlu0 %v965
          %v994 = vpop.xlane.xlu0 %993
          %995 = vmax.xlane.f32.xlu0 %v966
          %v996 = vpop.xlane.xlu0 %995
          %997 = vmax.xlane.f32.xlu0 %v967
          %v998 = vpop.xlane.xlu0 %997
          %999 = vmax.xlane.f32.xlu0 %v968
          %v1000 = vpop.xlane.xlu0 %999
          %v1017 = vand.u32 %v970, 4294967168
          %v1018 = vand.u32 %v972, 4294967168
          %v1019 = vand.u32 %v974, 4294967168
          %v1020 = vand.u32 %v976, 4294967168
          %v1021 = vand.u32 %v978, 4294967168
          %v1022 = vand.u32 %v980, 4294967168
          %v1023 = vand.u32 %v982, 4294967168
          %v1024 = vand.u32 %v984, 4294967168
          %v1025 = vand.u32 %v986, 4294967168
          %v1026 = vand.u32 %v988, 4294967168
          %v1027 = vand.u32 %v990, 4294967168
          %v1028 = vand.u32 %v992, 4294967168
          %v1029 = vand.u32 %v994, 4294967168
          %v1030 = vand.u32 %v996, 4294967168
          %v1031 = vand.u32 %v998, 4294967168
          %v1032 = vand.u32 %v1000, 4294967168
          %v1049 = vand.u32 %v970, 127
          %v1050 = vand.u32 %v972, 127
          %v1051 = vand.u32 %v974, 127
          %v1052 = vand.u32 %v976, 127
          %v1053 = vand.u32 %v978, 127
          %v1054 = vand.u32 %v980, 127
          %v1055 = vand.u32 %v982, 127
          %v1056 = vand.u32 %v984, 127
          %v1057 = vand.u32 %v986, 127
          %v1058 = vand.u32 %v988, 127
          %v1059 = vand.u32 %v990, 127
          %v1060 = vand.u32 %v992, 127
          %v1061 = vand.u32 %v994, 127
          %v1062 = vand.u32 %v996, 127
          %v1063 = vand.u32 %v998, 127
          %v1064 = vand.u32 %v1000, 127
          %vm1065 = vcmp.gt.f32.partialorder %v1017, 0.0
          %vm1066 = vcmp.gt.f32.partialorder %v1018, 0.0
          %vm1067 = vcmp.gt.f32.partialorder %v1019, 0.0
          %vm1068 = vcmp.gt.f32.partialorder %v1020, 0.0
          %vm1069 = vcmp.gt.f32.partialorder %v1021, 0.0
          %vm1070 = vcmp.gt.f32.partialorder %v1022, 0.0
          %vm1071 = vcmp.gt.f32.partialorder %v1023, 0.0
          %vm1072 = vcmp.gt.f32.partialorder %v1024, 0.0
          %vm1073 = vcmp.gt.f32.partialorder %v1025, 0.0
          %vm1074 = vcmp.gt.f32.partialorder %v1026, 0.0
          %vm1075 = vcmp.gt.f32.partialorder %v1027, 0.0
          %vm1076 = vcmp.gt.f32.partialorder %v1028, 0.0
          %vm1077 = vcmp.gt.f32.partialorder %v1029, 0.0
          %vm1078 = vcmp.gt.f32.partialorder %v1030, 0.0
          %vm1079 = vcmp.gt.f32.partialorder %v1031, 0.0
          %vm1080 = vcmp.gt.f32.partialorder %v1032, 0.0
          %v1081 = vand.u32 %v680, 4294967168
          %v1082 = vand.u32 %v681, 4294967168
          %v1083 = vand.u32 %v682, 4294967168
          %v1084 = vand.u32 %v683, 4294967168
          %v1085 = vand.u32 %v684, 4294967168
          %v1086 = vand.u32 %v685, 4294967168
          %v1087 = vand.u32 %v686, 4294967168
          %v1088 = vand.u32 %v687, 4294967168
          %v1089 = vand.u32 %v688, 4294967168
          %v1090 = vand.u32 %v689, 4294967168
          %v1091 = vand.u32 %v690, 4294967168
          %v1092 = vand.u32 %v691, 4294967168
          %v1093 = vand.u32 %v692, 4294967168
          %v1094 = vand.u32 %v693, 4294967168
          %v1095 = vand.u32 %v694, 4294967168
          %v1096 = vand.u32 %v695, 4294967168
          %v1113 = vadd.f32 %v1081, %v1017
          %v1114 = vadd.f32 %v1082, %v1018
          %v1115 = vadd.f32 %v1083, %v1019
          %v1116 = vadd.f32 %v1084, %v1020
          %v1117 = vadd.f32 %v1085, %v1021
          %v1118 = vadd.f32 %v1086, %v1022
          %v1119 = vadd.f32 %v1087, %v1023
          %v1120 = vadd.f32 %v1088, %v1024
          %v1121 = vadd.f32 %v1089, %v1025
          %v1122 = vadd.f32 %v1090, %v1026
          %v1123 = vadd.f32 %v1091, %v1027
          %v1124 = vadd.f32 %v1092, %v1028
          %v1125 = vadd.f32 %v1093, %v1029
          %v1126 = vadd.f32 %v1094, %v1030
          %v1127 = vadd.f32 %v1095, %v1031
          %v1128 = vadd.f32 %v1096, %v1032
          %v1145 = vand.u32 %v1113, 4294967168
          %v1146 = vand.u32 %v1114, 4294967168
          %v1147 = vand.u32 %v1115, 4294967168
          %v1148 = vand.u32 %v1116, 4294967168
          %v1149 = vand.u32 %v1117, 4294967168
          %v1150 = vand.u32 %v1118, 4294967168
          %v1151 = vand.u32 %v1119, 4294967168
          %v1152 = vand.u32 %v1120, 4294967168
          %v1153 = vand.u32 %v1121, 4294967168
          %v1154 = vand.u32 %v1122, 4294967168
          %v1155 = vand.u32 %v1123, 4294967168
          %v1156 = vand.u32 %v1124, 4294967168
          %v1157 = vand.u32 %v1125, 4294967168
          %v1158 = vand.u32 %v1126, 4294967168
          %v1159 = vand.u32 %v1127, 4294967168
          %v1160 = vand.u32 %v1128, 4294967168
          %v1161 = vor.u32 %v1145, %v210
          %v1162 = vor.u32 %v1146, %v211
          %v1163 = vor.u32 %v1147, %v212
          %v1164 = vor.u32 %v1148, %v213
          %v1165 = vor.u32 %v1149, %v214
          %v1166 = vor.u32 %v1150, %v215
          %v1167 = vor.u32 %v1151, %v216
          %v1168 = vor.u32 %v1152, %v217
          %v1169 = vor.u32 %v1153, %v218
          %v1170 = vor.u32 %v1154, %v219
          %v1171 = vor.u32 %v1155, %v220
          %v1172 = vor.u32 %v1156, %v221
          %v1173 = vor.u32 %v1157, %v222
          %v1174 = vor.u32 %v1158, %v223
          %v1175 = vor.u32 %v1159, %v224
          %v1176 = vor.u32 %v1160, %v225
          %1177 = vst [vmem:[#allocation2] sm:$0xff] %v1161
          %1178 = vst [vmem:[#allocation2 + $0x8] sm:$0xff] %v1162
          %1179 = vst [vmem:[#allocation2 + $0x10] sm:$0xff] %v1163
          %1180 = vst [vmem:[#allocation2 + $0x18] sm:$0xff] %v1164
          %1181 = vst [vmem:[#allocation2 + $0x20] sm:$0xff] %v1165
          %1182 = vst [vmem:[#allocation2 + $0x28] sm:$0xff] %v1166
          %1183 = vst [vmem:[#allocation2 + $0x30] sm:$0xff] %v1167
          %1184 = vst [vmem:[#allocation2 + $0x38] sm:$0xff] %v1168
          %1185 = vst [vmem:[#allocation2 + $0x40] sm:$0xff] %v1169
          %1186 = vst [vmem:[#allocation2 + $0x48] sm:$0xff] %v1170
          %1187 = vst [vmem:[#allocation2 + $0x50] sm:$0xff] %v1171
          %1188 = vst [vmem:[#allocation2 + $0x58] sm:$0xff] %v1172
          %1189 = vst [vmem:[#allocation2 + $0x60] sm:$0xff] %v1173
          %1190 = vst [vmem:[#allocation2 + $0x68] sm:$0xff] %v1174
          %1191 = vst [vmem:[#allocation2 + $0x70] sm:$0xff] %v1175
          %1192 = vst [vmem:[#allocation2 + $0x78] sm:$0xff] %v1176
          %v1193 = vsel %vm1065, %v1049, %v696
          %v1194 = vsel %vm1066, %v1050, %v697
          %v1195 = vsel %vm1067, %v1051, %v698
          %v1196 = vsel %vm1068, %v1052, %v699
          %v1197 = vsel %vm1069, %v1053, %v700
          %v1198 = vsel %vm1070, %v1054, %v701
          %v1199 = vsel %vm1071, %v1055, %v702
          %v1200 = vsel %vm1072, %v1056, %v703
          %v1201 = vsel %vm1073, %v1057, %v704
          %v1202 = vsel %vm1074, %v1058, %v705
          %v1203 = vsel %vm1075, %v1059, %v706
          %v1204 = vsel %vm1076, %v1060, %v707
          %v1205 = vsel %vm1077, %v1061, %v708
          %v1206 = vsel %vm1078, %v1062, %v709
          %v1207 = vsel %vm1079, %v1063, %v710
          %v1208 = vsel %vm1080, %v1064, %v711
          %1209 = vst.msk [vmem:[#allocation3] sm:$0xff] %vm657, %v1193
          %1210 = vst.msk [vmem:[#allocation3 + $0x8] sm:$0xff] %vm657, %v1194
          %1211 = vst.msk [vmem:[#allocation3 + $0x10] sm:$0xff] %vm657, %v1195
          %1212 = vst.msk [vmem:[#allocation3 + $0x18] sm:$0xff] %vm657, %v1196
          %1213 = vst.msk [vmem:[#allocation3 + $0x20] sm:$0xff] %vm657, %v1197
          %1214 = vst.msk [vmem:[#allocation3 + $0x28] sm:$0xff] %vm657, %v1198
          %1215 = vst.msk [vmem:[#allocation3 + $0x30] sm:$0xff] %vm657, %v1199
          %1216 = vst.msk [vmem:[#allocation3 + $0x38] sm:$0xff] %vm657, %v1200
          %1217 = vst.msk [vmem:[#allocation3 + $0x40] sm:$0xff] %vm657, %v1201
          %1218 = vst.msk [vmem:[#allocation3 + $0x48] sm:$0xff] %vm657, %v1202
          %1219 = vst.msk [vmem:[#allocation3 + $0x50] sm:$0xff] %vm657, %v1203
          %1220 = vst.msk [vmem:[#allocation3 + $0x58] sm:$0xff] %vm657, %v1204
          %1221 = vst.msk [vmem:[#allocation3 + $0x60] sm:$0xff] %vm657, %v1205
          %1222 = vst.msk [vmem:[#allocation3 + $0x68] sm:$0xff] %vm657, %v1206
          %1223 = vst.msk [vmem:[#allocation3 + $0x70] sm:$0xff] %vm657, %v1207
          %1224 = vst.msk [vmem:[#allocation3 + $0x78] sm:$0xff] %vm657, %v1208
        $region33: #{tpu_custom_call.1} parent=27 // loop_footer
          %s679 = sadd.s32 1, %s675
        $region34: #{tpu_custom_call.1} parent=27 // loop_footer_branch
          %674 = sbr.rel target = $region30
        $region35: #{tpu_custom_call.1} parent=27 // loop_exit
          _
        %v1225 = vld [vmem:[#allocation3] sm:$0xff]
        %v1226 = vld [vmem:[#allocation3 + $0x8] sm:$0xff]
        %v1227 = vld [vmem:[#allocation3 + $0x10] sm:$0xff]
        %v1228 = vld [vmem:[#allocation3 + $0x18] sm:$0xff]
        %v1229 = vld [vmem:[#allocation3 + $0x20] sm:$0xff]
        %v1230 = vld [vmem:[#allocation3 + $0x28] sm:$0xff]
        %v1231 = vld [vmem:[#allocation3 + $0x30] sm:$0xff]
        %v1232 = vld [vmem:[#allocation3 + $0x38] sm:$0xff]
        %v1233 = vld [vmem:[#allocation3 + $0x40] sm:$0xff]
        %v1234 = vld [vmem:[#allocation3 + $0x48] sm:$0xff]
        %v1235 = vld [vmem:[#allocation3 + $0x50] sm:$0xff]
        %v1236 = vld [vmem:[#allocation3 + $0x58] sm:$0xff]
        %v1237 = vld [vmem:[#allocation3 + $0x60] sm:$0xff]
        %v1238 = vld [vmem:[#allocation3 + $0x68] sm:$0xff]
        %v1239 = vld [vmem:[#allocation3 + $0x70] sm:$0xff]
        %v1240 = vld [vmem:[#allocation3 + $0x78] sm:$0xff]
        %1241 = vset.pattern.permute.xlu0 0
        %1242 = vperm.xlu0 %1241, %v1225
        %v1243 = vpop.permute.xlu0 %1242
        %1244 = vset.pattern.permute.xlu0 0
        %1245 = vperm.xlu0 %1244, %v1226
        %v1246 = vpop.permute.xlu0 %1245
        %1247 = vset.pattern.permute.xlu0 0
        %1248 = vperm.xlu0 %1247, %v1227
        %v1249 = vpop.permute.xlu0 %1248
        %1250 = vset.pattern.permute.xlu0 0
        %1251 = vperm.xlu0 %1250, %v1228
        %v1252 = vpop.permute.xlu0 %1251
        %1253 = vset.pattern.permute.xlu0 0
        %1254 = vperm.xlu0 %1253, %v1229
        %v1255 = vpop.permute.xlu0 %1254
        %1256 = vset.pattern.permute.xlu0 0
        %1257 = vperm.xlu0 %1256, %v1230
        %v1258 = vpop.permute.xlu0 %1257
        %1259 = vset.pattern.permute.xlu0 0
        %1260 = vperm.xlu0 %1259, %v1231
        %v1261 = vpop.permute.xlu0 %1260
        %1262 = vset.pattern.permute.xlu0 0
        %1263 = vperm.xlu0 %1262, %v1232
        %v1264 = vpop.permute.xlu0 %1263
        %1265 = vset.pattern.permute.xlu0 0
        %1266 = vperm.xlu0 %1265, %v1233
        %v1267 = vpop.permute.xlu0 %1266
        %1268 = vset.pattern.permute.xlu0 0
        %1269 = vperm.xlu0 %1268, %v1234
        %v1270 = vpop.permute.xlu0 %1269
        %1271 = vset.pattern.permute.xlu0 0
        %1272 = vperm.xlu0 %1271, %v1235
        %v1273 = vpop.permute.xlu0 %1272
        %1274 = vset.pattern.permute.xlu0 0
        %1275 = vperm.xlu0 %1274, %v1236
        %v1276 = vpop.permute.xlu0 %1275
        %1277 = vset.pattern.permute.xlu0 0
        %1278 = vperm.xlu0 %1277, %v1237
        %v1279 = vpop.permute.xlu0 %1278
        %1280 = vset.pattern.permute.xlu0 0
        %1281 = vperm.xlu0 %1280, %v1238
        %v1282 = vpop.permute.xlu0 %1281
        %1283 = vset.pattern.permute.xlu0 0
        %1284 = vperm.xlu0 %1283, %v1239
        %v1285 = vpop.permute.xlu0 %1284
        %1286 = vset.pattern.permute.xlu0 0
        %1287 = vperm.xlu0 %1286, %v1240
        %v1288 = vpop.permute.xlu0 %1287
        %vm1289 = vcmp.eq.s32.totalorder %v1243, %v227
        %vm1290 = vcmp.eq.s32.totalorder %v1246, %v227
        %vm1291 = vcmp.eq.s32.totalorder %v1249, %v227
        %vm1292 = vcmp.eq.s32.totalorder %v1252, %v227
        %vm1293 = vcmp.eq.s32.totalorder %v1255, %v227
        %vm1294 = vcmp.eq.s32.totalorder %v1258, %v227
        %vm1295 = vcmp.eq.s32.totalorder %v1261, %v227
        %vm1296 = vcmp.eq.s32.totalorder %v1264, %v227
        %vm1297 = vcmp.eq.s32.totalorder %v1267, %v227
        %vm1298 = vcmp.eq.s32.totalorder %v1270, %v227
        %vm1299 = vcmp.eq.s32.totalorder %v1273, %v227
        %vm1300 = vcmp.eq.s32.totalorder %v1276, %v227
        %vm1301 = vcmp.eq.s32.totalorder %v1279, %v227
        %vm1302 = vcmp.eq.s32.totalorder %v1282, %v227
        %vm1303 = vcmp.eq.s32.totalorder %v1285, %v227
        %vm1304 = vcmp.eq.s32.totalorder %v1288, %v227
        %v1305 = vsel %vm1289, %v210, 4294967295
        %v1306 = vsel %vm1290, %v211, 4294967295
        %v1307 = vsel %vm1291, %v212, 4294967295
        %v1308 = vsel %vm1292, %v213, 4294967295
        %v1309 = vsel %vm1293, %v214, 4294967295
        %v1310 = vsel %vm1294, %v215, 4294967295
        %v1311 = vsel %vm1295, %v216, 4294967295
        %v1312 = vsel %vm1296, %v217, 4294967295
        %v1313 = vsel %vm1297, %v218, 4294967295
        %v1314 = vsel %vm1298, %v219, 4294967295
        %v1315 = vsel %vm1299, %v220, 4294967295
        %v1316 = vsel %vm1300, %v221, 4294967295
        %v1317 = vsel %vm1301, %v222, 4294967295
        %v1318 = vsel %vm1302, %v223, 4294967295
        %v1319 = vsel %vm1303, %v224, 4294967295
        %v1320 = vsel %vm1304, %v225, 4294967295
        %vm1321 = vcmp.gt.s32.totalorder %v1305, %v1309
        %v1322 = vsel %vm1321, %v1305, %v1309
        %vm1323 = vcmp.gt.s32.totalorder %v1306, %v1310
        %v1324 = vsel %vm1323, %v1306, %v1310
        %vm1325 = vcmp.gt.s32.totalorder %v1307, %v1311
        %v1326 = vsel %vm1325, %v1307, %v1311
        %vm1327 = vcmp.gt.s32.totalorder %v1308, %v1312
        %v1328 = vsel %vm1327, %v1308, %v1312
        %vm1329 = vcmp.gt.s32.totalorder %v1322, %v1313
        %v1330 = vsel %vm1329, %v1322, %v1313
        %vm1331 = vcmp.gt.s32.totalorder %v1324, %v1314
        %v1332 = vsel %vm1331, %v1324, %v1314
        %vm1333 = vcmp.gt.s32.totalorder %v1326, %v1315
        %v1334 = vsel %vm1333, %v1326, %v1315
        %vm1335 = vcmp.gt.s32.totalorder %v1328, %v1316
        %v1336 = vsel %vm1335, %v1328, %v1316
        %vm1337 = vcmp.gt.s32.totalorder %v1330, %v1317
        %v1338 = vsel %vm1337, %v1330, %v1317
        %vm1339 = vcmp.gt.s32.totalorder %v1332, %v1318
        %v1340 = vsel %vm1339, %v1332, %v1318
        %vm1341 = vcmp.gt.s32.totalorder %v1334, %v1319
        %v1342 = vsel %vm1341, %v1334, %v1319
        %vm1343 = vcmp.gt.s32.totalorder %v1336, %v1320
        %v1344 = vsel %vm1343, %v1336, %v1320
        %vm1345 = vcmp.gt.s32.totalorder %v1338, %v1340
        %v1346 = vsel %vm1345, %v1338, %v1340
        %vm1347 = vcmp.gt.s32.totalorder %v1342, %v1344
        %v1348 = vsel %vm1347, %v1342, %v1344
        %vm1349 = vcmp.gt.s32.totalorder %v1346, %v1348
        %v1350 = vsel %vm1349, %v1346, %v1348
        %v1351 = vrot.slane %v1350, 4
        %vm1352 = vcmp.gt.s32.totalorder %v1350, %v1351
        %v1353 = vsel %vm1352, %v1350, %v1351
        %v1354 = vrot.slane %v1353, 2
        %vm1355 = vcmp.gt.s32.totalorder %v1353, %v1354
        %v1356 = vsel %vm1355, %v1353, %v1354
        %v1357 = vrot.slane %v1356, 1
        %vm1358 = vcmp.gt.s32.totalorder %v1356, %v1357
        %v1359 = vsel %vm1358, %v1356, %v1357
        %v1360 = vsel %vm1289, %v577, 0.0
        %v1361 = vsel %vm1290, %v578, 0.0
        %v1362 = vsel %vm1291, %v579, 0.0
        %v1363 = vsel %vm1292, %v580, 0.0
        %v1364 = vsel %vm1293, %v581, 0.0
        %v1365 = vsel %vm1294, %v582, 0.0
        %v1366 = vsel %vm1295, %v583, 0.0
        %v1367 = vsel %vm1296, %v584, 0.0
        %v1368 = vsel %vm1297, %v585, 0.0
        %v1369 = vsel %vm1298, %v586, 0.0
        %v1370 = vsel %vm1299, %v587, 0.0
        %v1371 = vsel %vm1300, %v588, 0.0
        %v1372 = vsel %vm1301, %v589, 0.0
        %v1373 = vsel %vm1302, %v590, 0.0
        %v1374 = vsel %vm1303, %v591, 0.0
        %v1375 = vsel %vm1304, %v592, 0.0
        %v1376 = vmax.f32 %v1360, %v1364
        %v1377 = vmax.f32 %v1361, %v1365
        %v1378 = vmax.f32 %v1362, %v1366
        %v1379 = vmax.f32 %v1363, %v1367
        %v1380 = vmax.f32 %v1376, %v1368
        %v1381 = vmax.f32 %v1377, %v1369
        %v1382 = vmax.f32 %v1378, %v1370
        %v1383 = vmax.f32 %v1379, %v1371
        %v1384 = vmax.f32 %v1380, %v1372
        %v1385 = vmax.f32 %v1381, %v1373
        %v1386 = vmax.f32 %v1382, %v1374
        %v1387 = vmax.f32 %v1383, %v1375
        %v1388 = vmax.f32 %v1384, %v1385
        %v1389 = vmax.f32 %v1386, %v1387
        %v1390 = vmax.f32 %v1388, %v1389
        %v1391 = vrot.slane %v1390, 4
        %v1392 = vmax.f32 %v1390, %v1391
        %v1393 = vrot.slane %v1392, 2
        %v1394 = vmax.f32 %v1392, %v1393
        %v1395 = vrot.slane %v1394, 1
        %v1396 = vmax.f32 %v1394, %v1395
        %1397 = vst [vmem:[%s186] sm:$0x1] %v1396
        %1398 = vst [vmem:[%s193] sm:$0x1] %v1359
        %s1399 = scalar_lea.vmem %s198, 4
        %v1400 = vld [vmem:[%s1399] sm:$0x7]
        %s1401 = scalar_lea.vmem %s205, 128
        %v1402 = vld [vmem:[%s1401] sm:$0xff]
        %v1403 = vld [vmem:[%s1401 + $0x8] sm:$0xff]
        %v1404 = vld [vmem:[%s1401 + $0x10] sm:$0xff]
        %v1405 = vld [vmem:[%s1401 + $0x18] sm:$0xff]
        %v1406 = vld [vmem:[%s1401 + $0x20] sm:$0xff]
        %v1407 = vld [vmem:[%s1401 + $0x28] sm:$0xff]
        %v1408 = vld [vmem:[%s1401 + $0x30] sm:$0xff]
        %v1409 = vld [vmem:[%s1401 + $0x38] sm:$0xff]
        %v1410 = vld [vmem:[%s1401 + $0x40] sm:$0xff]
        %v1411 = vld [vmem:[%s1401 + $0x48] sm:$0xff]
        %v1412 = vld [vmem:[%s1401 + $0x50] sm:$0xff]
        %v1413 = vld [vmem:[%s1401 + $0x58] sm:$0xff]
        %v1414 = vld [vmem:[%s1401 + $0x60] sm:$0xff]
        %v1415 = vld [vmem:[%s1401 + $0x68] sm:$0xff]
        %v1416 = vld [vmem:[%s1401 + $0x70] sm:$0xff]
        %v1417 = vld [vmem:[%s1401 + $0x78] sm:$0xff]
        %1419 = vset.pattern.permute.xlu0 0
        %1420 = vperm.xlu0 %1419, %v1402
        %v1421 = vpop.permute.xlu0 %1420
        %1424 = vset.pattern.permute.xlu0 0
        %1425 = vperm.xlu0 %1424, %v1403
        %v1426 = vpop.permute.xlu0 %1425
        %1429 = vset.pattern.permute.xlu0 0
        %1430 = vperm.xlu0 %1429, %v1404
        %v1431 = vpop.permute.xlu0 %1430
        %1434 = vset.pattern.permute.xlu0 0
        %1435 = vperm.xlu0 %1434, %v1405
        %v1436 = vpop.permute.xlu0 %1435
        %1439 = vset.pattern.permute.xlu0 0
        %1440 = vperm.xlu0 %1439, %v1406
        %v1441 = vpop.permute.xlu0 %1440
        %1444 = vset.pattern.permute.xlu0 0
        %1445 = vperm.xlu0 %1444, %v1407
        %v1446 = vpop.permute.xlu0 %1445
        %1449 = vset.pattern.permute.xlu0 0
        %1450 = vperm.xlu0 %1449, %v1408
        %v1451 = vpop.permute.xlu0 %1450
        %1454 = vset.pattern.permute.xlu0 0
        %1455 = vperm.xlu0 %1454, %v1409
        %v1456 = vpop.permute.xlu0 %1455
        %1459 = vset.pattern.permute.xlu0 0
        %1460 = vperm.xlu0 %1459, %v1410
        %v1461 = vpop.permute.xlu0 %1460
        %1464 = vset.pattern.permute.xlu0 0
        %1465 = vperm.xlu0 %1464, %v1411
        %v1466 = vpop.permute.xlu0 %1465
        %1469 = vset.pattern.permute.xlu0 0
        %1470 = vperm.xlu0 %1469, %v1412
        %v1471 = vpop.permute.xlu0 %1470
        %1474 = vset.pattern.permute.xlu0 0
        %1475 = vperm.xlu0 %1474, %v1413
        %v1476 = vpop.permute.xlu0 %1475
        %1479 = vset.pattern.permute.xlu0 0
        %1480 = vperm.xlu0 %1479, %v1414
        %v1481 = vpop.permute.xlu0 %1480
        %1484 = vset.pattern.permute.xlu0 0
        %1485 = vperm.xlu0 %1484, %v1415
        %v1486 = vpop.permute.xlu0 %1485
        %1489 = vset.pattern.permute.xlu0 0
        %1490 = vperm.xlu0 %1489, %v1416
        %v1491 = vpop.permute.xlu0 %1490
        %1494 = vset.pattern.permute.xlu0 0
        %1495 = vperm.xlu0 %1494, %v1417
        %v1496 = vpop.permute.xlu0 %1495
        %v1498 = vlaneseq
        %v1499 = vshrl.u32 %v1498, 7
        %v1500 = vsub.s32 0, %v1499
        %v1501 = vrot.slane %v1400, %v1500
        %v1502 = vsub.f32 %v1421, %v1501
        %v1503 = vsub.f32 %v1426, %v1501
        %v1504 = vsub.f32 %v1431, %v1501
        %v1505 = vsub.f32 %v1436, %v1501
        %v1506 = vsub.f32 %v1441, %v1501
        %v1507 = vsub.f32 %v1446, %v1501
        %v1508 = vsub.f32 %v1451, %v1501
        %v1509 = vsub.f32 %v1456, %v1501
        %v1510 = vsub.f32 %v1461, %v1501
        %v1511 = vsub.f32 %v1466, %v1501
        %v1512 = vsub.f32 %v1471, %v1501
        %v1513 = vsub.f32 %v1476, %v1501
        %v1514 = vsub.f32 %v1481, %v1501
        %v1515 = vsub.f32 %v1486, %v1501
        %v1516 = vsub.f32 %v1491, %v1501
        %v1517 = vsub.f32 %v1496, %v1501
        %v1518 = vmul.f32 %v1502, %v1502
        %v1519 = vmul.f32 %v1503, %v1503
        %v1520 = vmul.f32 %v1504, %v1504
        %v1521 = vmul.f32 %v1505, %v1505
        %v1522 = vmul.f32 %v1506, %v1506
        %v1523 = vmul.f32 %v1507, %v1507
        %v1524 = vmul.f32 %v1508, %v1508
        %v1525 = vmul.f32 %v1509, %v1509
        %v1526 = vmul.f32 %v1510, %v1510
        %v1527 = vmul.f32 %v1511, %v1511
        %v1528 = vmul.f32 %v1512, %v1512
        %v1529 = vmul.f32 %v1513, %v1513
        %v1530 = vmul.f32 %v1514, %v1514
        %v1531 = vmul.f32 %v1515, %v1515
        %v1532 = vmul.f32 %v1516, %v1516
        %v1533 = vmul.f32 %v1517, %v1517
        %1534 = vset.pattern.permute.xlu0 1
        %1535 = vperm.xlu0 %1534, %v1402
        %v1536 = vpop.permute.xlu0 %1535
        %1538 = vset.pattern.permute.xlu0 1
        %1539 = vperm.xlu0 %1538, %v1403
        %v1540 = vpop.permute.xlu0 %1539
        %1542 = vset.pattern.permute.xlu0 1
        %1543 = vperm.xlu0 %1542, %v1404
        %v1544 = vpop.permute.xlu0 %1543
        %1546 = vset.pattern.permute.xlu0 1
        %1547 = vperm.xlu0 %1546, %v1405
        %v1548 = vpop.permute.xlu0 %1547
        %1550 = vset.pattern.permute.xlu0 1
        %1551 = vperm.xlu0 %1550, %v1406
        %v1552 = vpop.permute.xlu0 %1551
        %1554 = vset.pattern.permute.xlu0 1
        %1555 = vperm.xlu0 %1554, %v1407
        %v1556 = vpop.permute.xlu0 %1555
        %1558 = vset.pattern.permute.xlu0 1
        %1559 = vperm.xlu0 %1558, %v1408
        %v1560 = vpop.permute.xlu0 %1559
        %1562 = vset.pattern.permute.xlu0 1
        %1563 = vperm.xlu0 %1562, %v1409
        %v1564 = vpop.permute.xlu0 %1563
        %1566 = vset.pattern.permute.xlu0 1
        %1567 = vperm.xlu0 %1566, %v1410
        %v1568 = vpop.permute.xlu0 %1567
        %1570 = vset.pattern.permute.xlu0 1
        %1571 = vperm.xlu0 %1570, %v1411
        %v1572 = vpop.permute.xlu0 %1571
        %1574 = vset.pattern.permute.xlu0 1
        %1575 = vperm.xlu0 %1574, %v1412
        %v1576 = vpop.permute.xlu0 %1575
        %1578 = vset.pattern.permute.xlu0 1
        %1579 = vperm.xlu0 %1578, %v1413
        %v1580 = vpop.permute.xlu0 %1579
        %1582 = vset.pattern.permute.xlu0 1
        %1583 = vperm.xlu0 %1582, %v1414
        %v1584 = vpop.permute.xlu0 %1583
        %1586 = vset.pattern.permute.xlu0 1
        %1587 = vperm.xlu0 %1586, %v1415
        %v1588 = vpop.permute.xlu0 %1587
        %1590 = vset.pattern.permute.xlu0 1
        %1591 = vperm.xlu0 %1590, %v1416
        %v1592 = vpop.permute.xlu0 %1591
        %1594 = vset.pattern.permute.xlu0 1
        %1595 = vperm.xlu0 %1594, %v1417
        %v1596 = vpop.permute.xlu0 %1595
        %v1598 = vlaneseq
        %v1599 = vshrl.u32 %v1598, 7
        %v1600 = vsub.s32 1, %v1599
        %v1601 = vrot.slane %v1400, %v1600
        %v1602 = vsub.f32 %v1536, %v1601
        %v1603 = vsub.f32 %v1540, %v1601
        %v1604 = vsub.f32 %v1544, %v1601
        %v1605 = vsub.f32 %v1548, %v1601
        %v1606 = vsub.f32 %v1552, %v1601
        %v1607 = vsub.f32 %v1556, %v1601
        %v1608 = vsub.f32 %v1560, %v1601
        %v1609 = vsub.f32 %v1564, %v1601
        %v1610 = vsub.f32 %v1568, %v1601
        %v1611 = vsub.f32 %v1572, %v1601
        %v1612 = vsub.f32 %v1576, %v1601
        %v1613 = vsub.f32 %v1580, %v1601
        %v1614 = vsub.f32 %v1584, %v1601
        %v1615 = vsub.f32 %v1588, %v1601
        %v1616 = vsub.f32 %v1592, %v1601
        %v1617 = vsub.f32 %v1596, %v1601
        %v1618 = vmul.f32 %v1602, %v1602
        %v1619 = vmul.f32 %v1603, %v1603
        %v1620 = vmul.f32 %v1604, %v1604
        %v1621 = vmul.f32 %v1605, %v1605
        %v1622 = vmul.f32 %v1606, %v1606
        %v1623 = vmul.f32 %v1607, %v1607
        %v1624 = vmul.f32 %v1608, %v1608
        %v1625 = vmul.f32 %v1609, %v1609
        %v1626 = vmul.f32 %v1610, %v1610
        %v1627 = vmul.f32 %v1611, %v1611
        %v1628 = vmul.f32 %v1612, %v1612
        %v1629 = vmul.f32 %v1613, %v1613
        %v1630 = vmul.f32 %v1614, %v1614
        %v1631 = vmul.f32 %v1615, %v1615
        %v1632 = vmul.f32 %v1616, %v1616
        %v1633 = vmul.f32 %v1617, %v1617
        %v1634 = vadd.f32 %v1518, %v1618
        %v1635 = vadd.f32 %v1519, %v1619
        %v1636 = vadd.f32 %v1520, %v1620
        %v1637 = vadd.f32 %v1521, %v1621
        %v1638 = vadd.f32 %v1522, %v1622
        %v1639 = vadd.f32 %v1523, %v1623
        %v1640 = vadd.f32 %v1524, %v1624
        %v1641 = vadd.f32 %v1525, %v1625
        %v1642 = vadd.f32 %v1526, %v1626
        %v1643 = vadd.f32 %v1527, %v1627
        %v1644 = vadd.f32 %v1528, %v1628
        %v1645 = vadd.f32 %v1529, %v1629
        %v1646 = vadd.f32 %v1530, %v1630
        %v1647 = vadd.f32 %v1531, %v1631
        %v1648 = vadd.f32 %v1532, %v1632
        %v1649 = vadd.f32 %v1533, %v1633
        %1650 = vset.pattern.permute.xlu0 2
        %1651 = vperm.xlu0 %1650, %v1402
        %v1652 = vpop.permute.xlu0 %1651
        %1654 = vset.pattern.permute.xlu0 2
        %1655 = vperm.xlu0 %1654, %v1403
        %v1656 = vpop.permute.xlu0 %1655
        %1658 = vset.pattern.permute.xlu0 2
        %1659 = vperm.xlu0 %1658, %v1404
        %v1660 = vpop.permute.xlu0 %1659
        %1662 = vset.pattern.permute.xlu0 2
        %1663 = vperm.xlu0 %1662, %v1405
        %v1664 = vpop.permute.xlu0 %1663
        %1666 = vset.pattern.permute.xlu0 2
        %1667 = vperm.xlu0 %1666, %v1406
        %v1668 = vpop.permute.xlu0 %1667
        %1670 = vset.pattern.permute.xlu0 2
        %1671 = vperm.xlu0 %1670, %v1407
        %v1672 = vpop.permute.xlu0 %1671
        %1674 = vset.pattern.permute.xlu0 2
        %1675 = vperm.xlu0 %1674, %v1408
        %v1676 = vpop.permute.xlu0 %1675
        %1678 = vset.pattern.permute.xlu0 2
        %1679 = vperm.xlu0 %1678, %v1409
        %v1680 = vpop.permute.xlu0 %1679
        %1682 = vset.pattern.permute.xlu0 2
        %1683 = vperm.xlu0 %1682, %v1410
        %v1684 = vpop.permute.xlu0 %1683
        %1686 = vset.pattern.permute.xlu0 2
        %1687 = vperm.xlu0 %1686, %v1411
        %v1688 = vpop.permute.xlu0 %1687
        %1690 = vset.pattern.permute.xlu0 2
        %1691 = vperm.xlu0 %1690, %v1412
        %v1692 = vpop.permute.xlu0 %1691
        %1694 = vset.pattern.permute.xlu0 2
        %1695 = vperm.xlu0 %1694, %v1413
        %v1696 = vpop.permute.xlu0 %1695
        %1698 = vset.pattern.permute.xlu0 2
        %1699 = vperm.xlu0 %1698, %v1414
        %v1700 = vpop.permute.xlu0 %1699
        %1702 = vset.pattern.permute.xlu0 2
        %1703 = vperm.xlu0 %1702, %v1415
        %v1704 = vpop.permute.xlu0 %1703
        %1706 = vset.pattern.permute.xlu0 2
        %1707 = vperm.xlu0 %1706, %v1416
        %v1708 = vpop.permute.xlu0 %1707
        %1710 = vset.pattern.permute.xlu0 2
        %1711 = vperm.xlu0 %1710, %v1417
        %v1712 = vpop.permute.xlu0 %1711
        %v1714 = vlaneseq
        %v1715 = vshrl.u32 %v1714, 7
        %v1716 = vsub.s32 2, %v1715
        %v1717 = vrot.slane %v1400, %v1716
        %v1718 = vsub.f32 %v1652, %v1717
        %v1719 = vsub.f32 %v1656, %v1717
        %v1720 = vsub.f32 %v1660, %v1717
        %v1721 = vsub.f32 %v1664, %v1717
        %v1722 = vsub.f32 %v1668, %v1717
        %v1723 = vsub.f32 %v1672, %v1717
        %v1724 = vsub.f32 %v1676, %v1717
        %v1725 = vsub.f32 %v1680, %v1717
        %v1726 = vsub.f32 %v1684, %v1717
        %v1727 = vsub.f32 %v1688, %v1717
        %v1728 = vsub.f32 %v1692, %v1717
        %v1729 = vsub.f32 %v1696, %v1717
        %v1730 = vsub.f32 %v1700, %v1717
        %v1731 = vsub.f32 %v1704, %v1717
        %v1732 = vsub.f32 %v1708, %v1717
        %v1733 = vsub.f32 %v1712, %v1717
        %v1734 = vmul.f32 %v1718, %v1718
        %v1735 = vmul.f32 %v1719, %v1719
        %v1736 = vmul.f32 %v1720, %v1720
        %v1737 = vmul.f32 %v1721, %v1721
        %v1738 = vmul.f32 %v1722, %v1722
        %v1739 = vmul.f32 %v1723, %v1723
        %v1740 = vmul.f32 %v1724, %v1724
        %v1741 = vmul.f32 %v1725, %v1725
        %v1742 = vmul.f32 %v1726, %v1726
        %v1743 = vmul.f32 %v1727, %v1727
        %v1744 = vmul.f32 %v1728, %v1728
        %v1745 = vmul.f32 %v1729, %v1729
        %v1746 = vmul.f32 %v1730, %v1730
        %v1747 = vmul.f32 %v1731, %v1731
        %v1748 = vmul.f32 %v1732, %v1732
        %v1749 = vmul.f32 %v1733, %v1733
        %v1750 = vadd.f32 %v1634, %v1734
        %v1751 = vadd.f32 %v1635, %v1735
        %v1752 = vadd.f32 %v1636, %v1736
        %v1753 = vadd.f32 %v1637, %v1737
        %v1754 = vadd.f32 %v1638, %v1738
        %v1755 = vadd.f32 %v1639, %v1739
        %v1756 = vadd.f32 %v1640, %v1740
        %v1757 = vadd.f32 %v1641, %v1741
        %v1758 = vadd.f32 %v1642, %v1742
        %v1759 = vadd.f32 %v1643, %v1743
        %v1760 = vadd.f32 %v1644, %v1744
        %v1761 = vadd.f32 %v1645, %v1745
        %v1762 = vadd.f32 %v1646, %v1746
        %v1763 = vadd.f32 %v1647, %v1747
        %v1764 = vadd.f32 %v1648, %v1748
        %v1765 = vadd.f32 %v1649, %v1749
        %v1782 = vand.u32 %v1750, 4294967168
        %v1783 = vand.u32 %v1751, 4294967168
        %v1784 = vand.u32 %v1752, 4294967168
        %v1785 = vand.u32 %v1753, 4294967168
        %v1786 = vand.u32 %v1754, 4294967168
        %v1787 = vand.u32 %v1755, 4294967168
        %v1788 = vand.u32 %v1756, 4294967168
        %v1789 = vand.u32 %v1757, 4294967168
        %v1790 = vand.u32 %v1758, 4294967168
        %v1791 = vand.u32 %v1759, 4294967168
        %v1792 = vand.u32 %v1760, 4294967168
        %v1793 = vand.u32 %v1761, 4294967168
        %v1794 = vand.u32 %v1762, 4294967168
        %v1795 = vand.u32 %v1763, 4294967168
        %v1796 = vand.u32 %v1764, 4294967168
        %v1797 = vand.u32 %v1765, 4294967168
        %v1798 = vor.u32 %v1782, %v210
        %v1799 = vor.u32 %v1783, %v211
        %v1800 = vor.u32 %v1784, %v212
        %v1801 = vor.u32 %v1785, %v213
        %v1802 = vor.u32 %v1786, %v214
        %v1803 = vor.u32 %v1787, %v215
        %v1804 = vor.u32 %v1788, %v216
        %v1805 = vor.u32 %v1789, %v217
        %v1806 = vor.u32 %v1790, %v218
        %v1807 = vor.u32 %v1791, %v219
        %v1808 = vor.u32 %v1792, %v220
        %v1809 = vor.u32 %v1793, %v221
        %v1810 = vor.u32 %v1794, %v222
        %v1811 = vor.u32 %v1795, %v223
        %v1812 = vor.u32 %v1796, %v224
        %v1813 = vor.u32 %v1797, %v225
        %1814 = vst [vmem:[#allocation2] sm:$0xff] %v1798
        %1815 = vst [vmem:[#allocation2 + $0x8] sm:$0xff] %v1799
        %1816 = vst [vmem:[#allocation2 + $0x10] sm:$0xff] %v1800
        %1817 = vst [vmem:[#allocation2 + $0x18] sm:$0xff] %v1801
        %1818 = vst [vmem:[#allocation2 + $0x20] sm:$0xff] %v1802
        %1819 = vst [vmem:[#allocation2 + $0x28] sm:$0xff] %v1803
        %1820 = vst [vmem:[#allocation2 + $0x30] sm:$0xff] %v1804
        %1821 = vst [vmem:[#allocation2 + $0x38] sm:$0xff] %v1805
        %1822 = vst [vmem:[#allocation2 + $0x40] sm:$0xff] %v1806
        %1823 = vst [vmem:[#allocation2 + $0x48] sm:$0xff] %v1807
        %1824 = vst [vmem:[#allocation2 + $0x50] sm:$0xff] %v1808
        %1825 = vst [vmem:[#allocation2 + $0x58] sm:$0xff] %v1809
        %1826 = vst [vmem:[#allocation2 + $0x60] sm:$0xff] %v1810
        %1827 = vst [vmem:[#allocation2 + $0x68] sm:$0xff] %v1811
        %1828 = vst [vmem:[#allocation2 + $0x70] sm:$0xff] %v1812
        %1829 = vst [vmem:[#allocation2 + $0x78] sm:$0xff] %v1813
        %1830 = vst.msk [vmem:[#allocation3] sm:$0xff] %vm657, 4294967295
        %1831 = vst.msk [vmem:[#allocation3 + $0x8] sm:$0xff] %vm657, 4294967295
        %1832 = vst.msk [vmem:[#allocation3 + $0x10] sm:$0xff] %vm657, 4294967295
        %1833 = vst.msk [vmem:[#allocation3 + $0x18] sm:$0xff] %vm657, 4294967295
        %1834 = vst.msk [vmem:[#allocation3 + $0x20] sm:$0xff] %vm657, 4294967295
        %1835 = vst.msk [vmem:[#allocation3 + $0x28] sm:$0xff] %vm657, 4294967295
        %1836 = vst.msk [vmem:[#allocation3 + $0x30] sm:$0xff] %vm657, 4294967295
        %1837 = vst.msk [vmem:[#allocation3 + $0x38] sm:$0xff] %vm657, 4294967295
        %1838 = vst.msk [vmem:[#allocation3 + $0x40] sm:$0xff] %vm657, 4294967295
        %1839 = vst.msk [vmem:[#allocation3 + $0x48] sm:$0xff] %vm657, 4294967295
        %1840 = vst.msk [vmem:[#allocation3 + $0x50] sm:$0xff] %vm657, 4294967295
        %1841 = vst.msk [vmem:[#allocation3 + $0x58] sm:$0xff] %vm657, 4294967295
        %1842 = vst.msk [vmem:[#allocation3 + $0x60] sm:$0xff] %vm657, 4294967295
        %1843 = vst.msk [vmem:[#allocation3 + $0x68] sm:$0xff] %vm657, 4294967295
        %1844 = vst.msk [vmem:[#allocation3 + $0x70] sm:$0xff] %vm657, 4294967295
        %1845 = vst.msk [vmem:[#allocation3 + $0x78] sm:$0xff] %vm657, 4294967295
        loop: start=0, step=1, limit=32
        $region36: #{tpu_custom_call.1} parent=27 // loop_pre_header
          _
        $region37: #{tpu_custom_call.1} parent=27 // loop_header
          %s1847 = sphi 0, %s1851
          %p1848 = scmp.ge.s32.totalorder %s1847, 32
        $region38: #{tpu_custom_call.1} parent=27 // loop_header_branch
          %1850 = sbr.rel (%p1848) target = $region42
        $region39: #{tpu_custom_call.1} parent=27 // loop_body
          %v1852 = vld [vmem:[#allocation2] sm:$0xff]
          %v1853 = vld [vmem:[#allocation2 + $0x8] sm:$0xff]
          %v1854 = vld [vmem:[#allocation2 + $0x10] sm:$0xff]
          %v1855 = vld [vmem:[#allocation2 + $0x18] sm:$0xff]
          %v1856 = vld [vmem:[#allocation2 + $0x20] sm:$0xff]
          %v1857 = vld [vmem:[#allocation2 + $0x28] sm:$0xff]
          %v1858 = vld [vmem:[#allocation2 + $0x30] sm:$0xff]
          %v1859 = vld [vmem:[#allocation2 + $0x38] sm:$0xff]
          %v1860 = vld [vmem:[#allocation2 + $0x40] sm:$0xff]
          %v1861 = vld [vmem:[#allocation2 + $0x48] sm:$0xff]
          %v1862 = vld [vmem:[#allocation2 + $0x50] sm:$0xff]
          %v1863 = vld [vmem:[#allocation2 + $0x58] sm:$0xff]
          %v1864 = vld [vmem:[#allocation2 + $0x60] sm:$0xff]
          %v1865 = vld [vmem:[#allocation2 + $0x68] sm:$0xff]
          %v1866 = vld [vmem:[#allocation2 + $0x70] sm:$0xff]
          %v1867 = vld [vmem:[#allocation2 + $0x78] sm:$0xff]
          %v1868 = vld [vmem:[#allocation3] sm:$0xff]
          %v1869 = vld [vmem:[#allocation3 + $0x8] sm:$0xff]
          %v1870 = vld [vmem:[#allocation3 + $0x10] sm:$0xff]
          %v1871 = vld [vmem:[#allocation3 + $0x18] sm:$0xff]
          %v1872 = vld [vmem:[#allocation3 + $0x20] sm:$0xff]
          %v1873 = vld [vmem:[#allocation3 + $0x28] sm:$0xff]
          %v1874 = vld [vmem:[#allocation3 + $0x30] sm:$0xff]
          %v1875 = vld [vmem:[#allocation3 + $0x38] sm:$0xff]
          %v1876 = vld [vmem:[#allocation3 + $0x40] sm:$0xff]
          %v1877 = vld [vmem:[#allocation3 + $0x48] sm:$0xff]
          %v1878 = vld [vmem:[#allocation3 + $0x50] sm:$0xff]
          %v1879 = vld [vmem:[#allocation3 + $0x58] sm:$0xff]
          %v1880 = vld [vmem:[#allocation3 + $0x60] sm:$0xff]
          %v1881 = vld [vmem:[#allocation3 + $0x68] sm:$0xff]
          %v1882 = vld [vmem:[#allocation3 + $0x70] sm:$0xff]
          %v1883 = vld [vmem:[#allocation3 + $0x78] sm:$0xff]
          %1884 = vset.pattern.permute.xlu0 0
          %1885 = vperm.xlu0 %1884, %v1868
          %v1886 = vpop.permute.xlu0 %1885
          %1887 = vset.pattern.permute.xlu0 0
          %1888 = vperm.xlu0 %1887, %v1869
          %v1889 = vpop.permute.xlu0 %1888
          %1890 = vset.pattern.permute.xlu0 0
          %1891 = vperm.xlu0 %1890, %v1870
          %v1892 = vpop.permute.xlu0 %1891
          %1893 = vset.pattern.permute.xlu0 0
          %1894 = vperm.xlu0 %1893, %v1871
          %v1895 = vpop.permute.xlu0 %1894
          %1896 = vset.pattern.permute.xlu0 0
          %1897 = vperm.xlu0 %1896, %v1872
          %v1898 = vpop.permute.xlu0 %1897
          %1899 = vset.pattern.permute.xlu0 0
          %1900 = vperm.xlu0 %1899, %v1873
          %v1901 = vpop.permute.xlu0 %1900
          %1902 = vset.pattern.permute.xlu0 0
          %1903 = vperm.xlu0 %1902, %v1874
          %v1904 = vpop.permute.xlu0 %1903
          %1905 = vset.pattern.permute.xlu0 0
          %1906 = vperm.xlu0 %1905, %v1875
          %v1907 = vpop.permute.xlu0 %1906
          %1908 = vset.pattern.permute.xlu0 0
          %1909 = vperm.xlu0 %1908, %v1876
          %v1910 = vpop.permute.xlu0 %1909
          %1911 = vset.pattern.permute.xlu0 0
          %1912 = vperm.xlu0 %1911, %v1877
          %v1913 = vpop.permute.xlu0 %1912
          %1914 = vset.pattern.permute.xlu0 0
          %1915 = vperm.xlu0 %1914, %v1878
          %v1916 = vpop.permute.xlu0 %1915
          %1917 = vset.pattern.permute.xlu0 0
          %1918 = vperm.xlu0 %1917, %v1879
          %v1919 = vpop.permute.xlu0 %1918
          %1920 = vset.pattern.permute.xlu0 0
          %1921 = vperm.xlu0 %1920, %v1880
          %v1922 = vpop.permute.xlu0 %1921
          %1923 = vset.pattern.permute.xlu0 0
          %1924 = vperm.xlu0 %1923, %v1881
          %v1925 = vpop.permute.xlu0 %1924
          %1926 = vset.pattern.permute.xlu0 0
          %1927 = vperm.xlu0 %1926, %v1882
          %v1928 = vpop.permute.xlu0 %1927
          %1929 = vset.pattern.permute.xlu0 0
          %1930 = vperm.xlu0 %1929, %v1883
          %v1931 = vpop.permute.xlu0 %1930
          %vm1932 = vcmp.eq.s32.totalorder %v1886, %v227
          %vm1933 = vcmp.eq.s32.totalorder %v1889, %v227
          %vm1934 = vcmp.eq.s32.totalorder %v1892, %v227
          %vm1935 = vcmp.eq.s32.totalorder %v1895, %v227
          %vm1936 = vcmp.eq.s32.totalorder %v1898, %v227
          %vm1937 = vcmp.eq.s32.totalorder %v1901, %v227
          %vm1938 = vcmp.eq.s32.totalorder %v1904, %v227
          %vm1939 = vcmp.eq.s32.totalorder %v1907, %v227
          %vm1940 = vcmp.eq.s32.totalorder %v1910, %v227
          %vm1941 = vcmp.eq.s32.totalorder %v1913, %v227
          %vm1942 = vcmp.eq.s32.totalorder %v1916, %v227
          %vm1943 = vcmp.eq.s32.totalorder %v1919, %v227
          %vm1944 = vcmp.eq.s32.totalorder %v1922, %v227
          %vm1945 = vcmp.eq.s32.totalorder %v1925, %v227
          %vm1946 = vcmp.eq.s32.totalorder %v1928, %v227
          %vm1947 = vcmp.eq.s32.totalorder %v1931, %v227
          %v1948 = vsel %vm1932, 1.0, 0.0
          %v1949 = vsel %vm1933, 1.0, 0.0
          %v1950 = vsel %vm1934, 1.0, 0.0
          %v1951 = vsel %vm1935, 1.0, 0.0
          %v1952 = vsel %vm1936, 1.0, 0.0
          %v1953 = vsel %vm1937, 1.0, 0.0
          %v1954 = vsel %vm1938, 1.0, 0.0
          %v1955 = vsel %vm1939, 1.0, 0.0
          %v1956 = vsel %vm1940, 1.0, 0.0
          %v1957 = vsel %vm1941, 1.0, 0.0
          %v1958 = vsel %vm1942, 1.0, 0.0
          %v1959 = vsel %vm1943, 1.0, 0.0
          %v1960 = vsel %vm1944, 1.0, 0.0
          %v1961 = vsel %vm1945, 1.0, 0.0
          %v1962 = vsel %vm1946, 1.0, 0.0
          %v1963 = vsel %vm1947, 1.0, 0.0
          %v1964 = vmax.f32 %v1948, %v1952
          %v1965 = vmax.f32 %v1949, %v1953
          %v1966 = vmax.f32 %v1950, %v1954
          %v1967 = vmax.f32 %v1951, %v1955
          %v1968 = vmax.f32 %v1964, %v1956
          %v1969 = vmax.f32 %v1965, %v1957
          %v1970 = vmax.f32 %v1966, %v1958
          %v1971 = vmax.f32 %v1967, %v1959
          %v1972 = vmax.f32 %v1968, %v1960
          %v1973 = vmax.f32 %v1969, %v1961
          %v1974 = vmax.f32 %v1970, %v1962
          %v1975 = vmax.f32 %v1971, %v1963
          %v1976 = vmax.f32 %v1972, %v1973
          %v1977 = vmax.f32 %v1974, %v1975
          %v1978 = vmax.f32 %v1976, %v1977
          %v1979 = vrot.slane %v1978, 4
          %v1980 = vmax.f32 %v1978, %v1979
          %v1981 = vrot.slane %v1980, 2
          %v1982 = vmax.f32 %v1980, %v1981
          %v1983 = vrot.slane %v1982, 1
          %v1984 = vmax.f32 %v1982, %v1983
          %vm1985 = vcmp.gt.f32.partialorder %v1984, 0.0
          %vm1986 = vcmp.lt.s32.totalorder %v1852, %v1856
          %v1987 = vsel %vm1986, %v1852, %v1856
          %vm1988 = vcmp.lt.s32.totalorder %v1853, %v1857
          %v1989 = vsel %vm1988, %v1853, %v1857
          %vm1990 = vcmp.lt.s32.totalorder %v1854, %v1858
          %v1991 = vsel %vm1990, %v1854, %v1858
          %vm1992 = vcmp.lt.s32.totalorder %v1855, %v1859
          %v1993 = vsel %vm1992, %v1855, %v1859
          %vm1994 = vcmp.lt.s32.totalorder %v1987, %v1860
          %v1995 = vsel %vm1994, %v1987, %v1860
          %vm1996 = vcmp.lt.s32.totalorder %v1989, %v1861
          %v1997 = vsel %vm1996, %v1989, %v1861
          %vm1998 = vcmp.lt.s32.totalorder %v1991, %v1862
          %v1999 = vsel %vm1998, %v1991, %v1862
          %vm2000 = vcmp.lt.s32.totalorder %v1993, %v1863
          %v2001 = vsel %vm2000, %v1993, %v1863
          %vm2002 = vcmp.lt.s32.totalorder %v1995, %v1864
          %v2003 = vsel %vm2002, %v1995, %v1864
          %vm2004 = vcmp.lt.s32.totalorder %v1997, %v1865
          %v2005 = vsel %vm2004, %v1997, %v1865
          %vm2006 = vcmp.lt.s32.totalorder %v1999, %v1866
          %v2007 = vsel %vm2006, %v1999, %v1866
          %vm2008 = vcmp.lt.s32.totalorder %v2001, %v1867
          %v2009 = vsel %vm2008, %v2001, %v1867
          %vm2010 = vcmp.lt.s32.totalorder %v2003, %v2005
          %v2011 = vsel %vm2010, %v2003, %v2005
          %vm2012 = vcmp.lt.s32.totalorder %v2007, %v2009
          %v2013 = vsel %vm2012, %v2007, %v2009
          %vm2014 = vcmp.lt.s32.totalorder %v2011, %v2013
          %v2015 = vsel %vm2014, %v2011, %v2013
          %v2016 = vrot.slane %v2015, 4
          %vm2017 = vcmp.lt.s32.totalorder %v2015, %v2016
          %v2018 = vsel %vm2017, %v2015, %v2016
          %v2019 = vrot.slane %v2018, 2
          %vm2020 = vcmp.lt.s32.totalorder %v2018, %v2019
          %v2021 = vsel %vm2020, %v2018, %v2019
          %v2022 = vrot.slane %v2021, 1
          %vm2023 = vcmp.lt.s32.totalorder %v2021, %v2022
          %v2024 = vsel %vm2023, %v2021, %v2022
          %v2025 = vand.u32 %v2024, 4294967168
          %vm2027 = vcmp.eq.s32.totalorder %v1852, %v2024
          %vm2028 = vcmp.eq.s32.totalorder %v1853, %v2024
          %vm2029 = vcmp.eq.s32.totalorder %v1854, %v2024
          %vm2030 = vcmp.eq.s32.totalorder %v1855, %v2024
          %vm2031 = vcmp.eq.s32.totalorder %v1856, %v2024
          %vm2032 = vcmp.eq.s32.totalorder %v1857, %v2024
          %vm2033 = vcmp.eq.s32.totalorder %v1858, %v2024
          %vm2034 = vcmp.eq.s32.totalorder %v1859, %v2024
          %vm2035 = vcmp.eq.s32.totalorder %v1860, %v2024
          %vm2036 = vcmp.eq.s32.totalorder %v1861, %v2024
          %vm2037 = vcmp.eq.s32.totalorder %v1862, %v2024
          %vm2038 = vcmp.eq.s32.totalorder %v1863, %v2024
          %vm2039 = vcmp.eq.s32.totalorder %v1864, %v2024
          %vm2040 = vcmp.eq.s32.totalorder %v1865, %v2024
          %vm2041 = vcmp.eq.s32.totalorder %v1866, %v2024
          %vm2042 = vcmp.eq.s32.totalorder %v1867, %v2024
          %v2043 = vsel %vm2027, 2139095039, %v1852
          %v2044 = vsel %vm2028, 2139095039, %v1853
          %v2045 = vsel %vm2029, 2139095039, %v1854
          %v2046 = vsel %vm2030, 2139095039, %v1855
          %v2047 = vsel %vm2031, 2139095039, %v1856
          %v2048 = vsel %vm2032, 2139095039, %v1857
          %v2049 = vsel %vm2033, 2139095039, %v1858
          %v2050 = vsel %vm2034, 2139095039, %v1859
          %v2051 = vsel %vm2035, 2139095039, %v1860
          %v2052 = vsel %vm2036, 2139095039, %v1861
          %v2053 = vsel %vm2037, 2139095039, %v1862
          %v2054 = vsel %vm2038, 2139095039, %v1863
          %v2055 = vsel %vm2039, 2139095039, %v1864
          %v2056 = vsel %vm2040, 2139095039, %v1865
          %v2057 = vsel %vm2041, 2139095039, %v1866
          %v2058 = vsel %vm2042, 2139095039, %v1867
          %vm2059 = vcmp.lt.s32.totalorder %v2043, %v2047
          %v2060 = vsel %vm2059, %v2043, %v2047
          %vm2061 = vcmp.lt.s32.totalorder %v2044, %v2048
          %v2062 = vsel %vm2061, %v2044, %v2048
          %vm2063 = vcmp.lt.s32.totalorder %v2045, %v2049
          %v2064 = vsel %vm2063, %v2045, %v2049
          %vm2065 = vcmp.lt.s32.totalorder %v2046, %v2050
          %v2066 = vsel %vm2065, %v2046, %v2050
          %vm2067 = vcmp.lt.s32.totalorder %v2060, %v2051
          %v2068 = vsel %vm2067, %v2060, %v2051
          %vm2069 = vcmp.lt.s32.totalorder %v2062, %v2052
          %v2070 = vsel %vm2069, %v2062, %v2052
          %vm2071 = vcmp.lt.s32.totalorder %v2064, %v2053
          %v2072 = vsel %vm2071, %v2064, %v2053
          %vm2073 = vcmp.lt.s32.totalorder %v2066, %v2054
          %v2074 = vsel %vm2073, %v2066, %v2054
          %vm2075 = vcmp.lt.s32.totalorder %v2068, %v2055
          %v2076 = vsel %vm2075, %v2068, %v2055
          %vm2077 = vcmp.lt.s32.totalorder %v2070, %v2056
          %v2078 = vsel %vm2077, %v2070, %v2056
          %vm2079 = vcmp.lt.s32.totalorder %v2072, %v2057
          %v2080 = vsel %vm2079, %v2072, %v2057
          %vm2081 = vcmp.lt.s32.totalorder %v2074, %v2058
          %v2082 = vsel %vm2081, %v2074, %v2058
          %vm2083 = vcmp.lt.s32.totalorder %v2076, %v2078
          %v2084 = vsel %vm2083, %v2076, %v2078
          %vm2085 = vcmp.lt.s32.totalorder %v2080, %v2082
          %v2086 = vsel %vm2085, %v2080, %v2082
          %vm2087 = vcmp.lt.s32.totalorder %v2084, %v2086
          %v2088 = vsel %vm2087, %v2084, %v2086
          %v2089 = vrot.slane %v2088, 4
          %vm2090 = vcmp.lt.s32.totalorder %v2088, %v2089
          %v2091 = vsel %vm2090, %v2088, %v2089
          %v2092 = vrot.slane %v2091, 2
          %vm2093 = vcmp.lt.s32.totalorder %v2091, %v2092
          %v2094 = vsel %vm2093, %v2091, %v2092
          %v2095 = vrot.slane %v2094, 1
          %vm2096 = vcmp.lt.s32.totalorder %v2094, %v2095
          %v2097 = vsel %vm2096, %v2094, %v2095
          %v2098 = vand.u32 %v2097, 4294967168
          %v2100 = vsub.f32 %v2098, %v2025
          %v2101 = vadd.f32 %v2100, 0.02
          %v2103 = vand.u32 %v2101, 4294967168
          %v2104 = vor.u32 %v2103, %v227
          %vm2106 = vmxor %vm1985, 1
          %v2107 = vsel %vm2106, 1, 0
          %vm2108 = vcmp.eq.s32.totalorder %v2107, 1
          %vm2109 = vmand %vm2027, %vm2108
          %vm2110 = vmand %vm2028, %vm2108
          %vm2111 = vmand %vm2029, %vm2108
          %vm2112 = vmand %vm2030, %vm2108
          %vm2113 = vmand %vm2031, %vm2108
          %vm2114 = vmand %vm2032, %vm2108
          %vm2115 = vmand %vm2033, %vm2108
          %vm2116 = vmand %vm2034, %vm2108
          %vm2117 = vmand %vm2035, %vm2108
          %vm2118 = vmand %vm2036, %vm2108
          %vm2119 = vmand %vm2037, %vm2108
          %vm2120 = vmand %vm2038, %vm2108
          %vm2121 = vmand %vm2039, %vm2108
          %vm2122 = vmand %vm2040, %vm2108
          %vm2123 = vmand %vm2041, %vm2108
          %vm2124 = vmand %vm2042, %vm2108
          %v2125 = vsel %vm2109, %v2104, 0.0
          %v2126 = vsel %vm2110, %v2104, 0.0
          %v2127 = vsel %vm2111, %v2104, 0.0
          %v2128 = vsel %vm2112, %v2104, 0.0
          %v2129 = vsel %vm2113, %v2104, 0.0
          %v2130 = vsel %vm2114, %v2104, 0.0
          %v2131 = vsel %vm2115, %v2104, 0.0
          %v2132 = vsel %vm2116, %v2104, 0.0
          %v2133 = vsel %vm2117, %v2104, 0.0
          %v2134 = vsel %vm2118, %v2104, 0.0
          %v2135 = vsel %vm2119, %v2104, 0.0
          %v2136 = vsel %vm2120, %v2104, 0.0
          %v2137 = vsel %vm2121, %v2104, 0.0
          %v2138 = vsel %vm2122, %v2104, 0.0
          %v2139 = vsel %vm2123, %v2104, 0.0
          %v2140 = vsel %vm2124, %v2104, 0.0
          %2141 = vmax.xlane.f32.xlu0 %v2125
          %v2142 = vpop.xlane.xlu0 %2141
          %2143 = vmax.xlane.f32.xlu0 %v2126
          %v2144 = vpop.xlane.xlu0 %2143
          %2145 = vmax.xlane.f32.xlu0 %v2127
          %v2146 = vpop.xlane.xlu0 %2145
          %2147 = vmax.xlane.f32.xlu0 %v2128
          %v2148 = vpop.xlane.xlu0 %2147
          %2149 = vmax.xlane.f32.xlu0 %v2129
          %v2150 = vpop.xlane.xlu0 %2149
          %2151 = vmax.xlane.f32.xlu0 %v2130
          %v2152 = vpop.xlane.xlu0 %2151
          %2153 = vmax.xlane.f32.xlu0 %v2131
          %v2154 = vpop.xlane.xlu0 %2153
          %2155 = vmax.xlane.f32.xlu0 %v2132
          %v2156 = vpop.xlane.xlu0 %2155
          %2157 = vmax.xlane.f32.xlu0 %v2133
          %v2158 = vpop.xlane.xlu0 %2157
          %2159 = vmax.xlane.f32.xlu0 %v2134
          %v2160 = vpop.xlane.xlu0 %2159
          %2161 = vmax.xlane.f32.xlu0 %v2135
          %v2162 = vpop.xlane.xlu0 %2161
          %2163 = vmax.xlane.f32.xlu0 %v2136
          %v2164 = vpop.xlane.xlu0 %2163
          %2165 = vmax.xlane.f32.xlu0 %v2137
          %v2166 = vpop.xlane.xlu0 %2165
          %2167 = vmax.xlane.f32.xlu0 %v2138
          %v2168 = vpop.xlane.xlu0 %2167
          %2169 = vmax.xlane.f32.xlu0 %v2139
          %v2170 = vpop.xlane.xlu0 %2169
          %2171 = vmax.xlane.f32.xlu0 %v2140
          %v2172 = vpop.xlane.xlu0 %2171
          %v2189 = vand.u32 %v2142, 4294967168
          %v2190 = vand.u32 %v2144, 4294967168
          %v2191 = vand.u32 %v2146, 4294967168
          %v2192 = vand.u32 %v2148, 4294967168
          %v2193 = vand.u32 %v2150, 4294967168
          %v2194 = vand.u32 %v2152, 4294967168
          %v2195 = vand.u32 %v2154, 4294967168
          %v2196 = vand.u32 %v2156, 4294967168
          %v2197 = vand.u32 %v2158, 4294967168
          %v2198 = vand.u32 %v2160, 4294967168
          %v2199 = vand.u32 %v2162, 4294967168
          %v2200 = vand.u32 %v2164, 4294967168
          %v2201 = vand.u32 %v2166, 4294967168
          %v2202 = vand.u32 %v2168, 4294967168
          %v2203 = vand.u32 %v2170, 4294967168
          %v2204 = vand.u32 %v2172, 4294967168
          %v2221 = vand.u32 %v2142, 127
          %v2222 = vand.u32 %v2144, 127
          %v2223 = vand.u32 %v2146, 127
          %v2224 = vand.u32 %v2148, 127
          %v2225 = vand.u32 %v2150, 127
          %v2226 = vand.u32 %v2152, 127
          %v2227 = vand.u32 %v2154, 127
          %v2228 = vand.u32 %v2156, 127
          %v2229 = vand.u32 %v2158, 127
          %v2230 = vand.u32 %v2160, 127
          %v2231 = vand.u32 %v2162, 127
          %v2232 = vand.u32 %v2164, 127
          %v2233 = vand.u32 %v2166, 127
          %v2234 = vand.u32 %v2168, 127
          %v2235 = vand.u32 %v2170, 127
          %v2236 = vand.u32 %v2172, 127
          %vm2237 = vcmp.gt.f32.partialorder %v2189, 0.0
          %vm2238 = vcmp.gt.f32.partialorder %v2190, 0.0
          %vm2239 = vcmp.gt.f32.partialorder %v2191, 0.0
          %vm2240 = vcmp.gt.f32.partialorder %v2192, 0.0
          %vm2241 = vcmp.gt.f32.partialorder %v2193, 0.0
          %vm2242 = vcmp.gt.f32.partialorder %v2194, 0.0
          %vm2243 = vcmp.gt.f32.partialorder %v2195, 0.0
          %vm2244 = vcmp.gt.f32.partialorder %v2196, 0.0
          %vm2245 = vcmp.gt.f32.partialorder %v2197, 0.0
          %vm2246 = vcmp.gt.f32.partialorder %v2198, 0.0
          %vm2247 = vcmp.gt.f32.partialorder %v2199, 0.0
          %vm2248 = vcmp.gt.f32.partialorder %v2200, 0.0
          %vm2249 = vcmp.gt.f32.partialorder %v2201, 0.0
          %vm2250 = vcmp.gt.f32.partialorder %v2202, 0.0
          %vm2251 = vcmp.gt.f32.partialorder %v2203, 0.0
          %vm2252 = vcmp.gt.f32.partialorder %v2204, 0.0
          %v2253 = vand.u32 %v1852, 4294967168
          %v2254 = vand.u32 %v1853, 4294967168
          %v2255 = vand.u32 %v1854, 4294967168
          %v2256 = vand.u32 %v1855, 4294967168
          %v2257 = vand.u32 %v1856, 4294967168
          %v2258 = vand.u32 %v1857, 4294967168
          %v2259 = vand.u32 %v1858, 4294967168
          %v2260 = vand.u32 %v1859, 4294967168
          %v2261 = vand.u32 %v1860, 4294967168
          %v2262 = vand.u32 %v1861, 4294967168
          %v2263 = vand.u32 %v1862, 4294967168
          %v2264 = vand.u32 %v1863, 4294967168
          %v2265 = vand.u32 %v1864, 4294967168
          %v2266 = vand.u32 %v1865, 4294967168
          %v2267 = vand.u32 %v1866, 4294967168
          %v2268 = vand.u32 %v1867, 4294967168
          %v2285 = vadd.f32 %v2253, %v2189
          %v2286 = vadd.f32 %v2254, %v2190
          %v2287 = vadd.f32 %v2255, %v2191
          %v2288 = vadd.f32 %v2256, %v2192
          %v2289 = vadd.f32 %v2257, %v2193
          %v2290 = vadd.f32 %v2258, %v2194
          %v2291 = vadd.f32 %v2259, %v2195
          %v2292 = vadd.f32 %v2260, %v2196
          %v2293 = vadd.f32 %v2261, %v2197
          %v2294 = vadd.f32 %v2262, %v2198
          %v2295 = vadd.f32 %v2263, %v2199
          %v2296 = vadd.f32 %v2264, %v2200
          %v2297 = vadd.f32 %v2265, %v2201
          %v2298 = vadd.f32 %v2266, %v2202
          %v2299 = vadd.f32 %v2267, %v2203
          %v2300 = vadd.f32 %v2268, %v2204
          %v2317 = vand.u32 %v2285, 4294967168
          %v2318 = vand.u32 %v2286, 4294967168
          %v2319 = vand.u32 %v2287, 4294967168
          %v2320 = vand.u32 %v2288, 4294967168
          %v2321 = vand.u32 %v2289, 4294967168
          %v2322 = vand.u32 %v2290, 4294967168
          %v2323 = vand.u32 %v2291, 4294967168
          %v2324 = vand.u32 %v2292, 4294967168
          %v2325 = vand.u32 %v2293, 4294967168
          %v2326 = vand.u32 %v2294, 4294967168
          %v2327 = vand.u32 %v2295, 4294967168
          %v2328 = vand.u32 %v2296, 4294967168
          %v2329 = vand.u32 %v2297, 4294967168
          %v2330 = vand.u32 %v2298, 4294967168
          %v2331 = vand.u32 %v2299, 4294967168
          %v2332 = vand.u32 %v2300, 4294967168
          %v2333 = vor.u32 %v2317, %v210
          %v2334 = vor.u32 %v2318, %v211
          %v2335 = vor.u32 %v2319, %v212
          %v2336 = vor.u32 %v2320, %v213
          %v2337 = vor.u32 %v2321, %v214
          %v2338 = vor.u32 %v2322, %v215
          %v2339 = vor.u32 %v2323, %v216
          %v2340 = vor.u32 %v2324, %v217
          %v2341 = vor.u32 %v2325, %v218
          %v2342 = vor.u32 %v2326, %v219
          %v2343 = vor.u32 %v2327, %v220
          %v2344 = vor.u32 %v2328, %v221
          %v2345 = vor.u32 %v2329, %v222
          %v2346 = vor.u32 %v2330, %v223
          %v2347 = vor.u32 %v2331, %v224
          %v2348 = vor.u32 %v2332, %v225
          %2349 = vst [vmem:[#allocation2] sm:$0xff] %v2333
          %2350 = vst [vmem:[#allocation2 + $0x8] sm:$0xff] %v2334
          %2351 = vst [vmem:[#allocation2 + $0x10] sm:$0xff] %v2335
          %2352 = vst [vmem:[#allocation2 + $0x18] sm:$0xff] %v2336
          %2353 = vst [vmem:[#allocation2 + $0x20] sm:$0xff] %v2337
          %2354 = vst [vmem:[#allocation2 + $0x28] sm:$0xff] %v2338
          %2355 = vst [vmem:[#allocation2 + $0x30] sm:$0xff] %v2339
          %2356 = vst [vmem:[#allocation2 + $0x38] sm:$0xff] %v2340
          %2357 = vst [vmem:[#allocation2 + $0x40] sm:$0xff] %v2341
          %2358 = vst [vmem:[#allocation2 + $0x48] sm:$0xff] %v2342
          %2359 = vst [vmem:[#allocation2 + $0x50] sm:$0xff] %v2343
          %2360 = vst [vmem:[#allocation2 + $0x58] sm:$0xff] %v2344
          %2361 = vst [vmem:[#allocation2 + $0x60] sm:$0xff] %v2345
          %2362 = vst [vmem:[#allocation2 + $0x68] sm:$0xff] %v2346
          %2363 = vst [vmem:[#allocation2 + $0x70] sm:$0xff] %v2347
          %2364 = vst [vmem:[#allocation2 + $0x78] sm:$0xff] %v2348
          %v2365 = vsel %vm2237, %v2221, %v1868
          %v2366 = vsel %vm2238, %v2222, %v1869
          %v2367 = vsel %vm2239, %v2223, %v1870
          %v2368 = vsel %vm2240, %v2224, %v1871
          %v2369 = vsel %vm2241, %v2225, %v1872
          %v2370 = vsel %vm2242, %v2226, %v1873
          %v2371 = vsel %vm2243, %v2227, %v1874
          %v2372 = vsel %vm2244, %v2228, %v1875
          %v2373 = vsel %vm2245, %v2229, %v1876
          %v2374 = vsel %vm2246, %v2230, %v1877
          %v2375 = vsel %vm2247, %v2231, %v1878
          %v2376 = vsel %vm2248, %v2232, %v1879
          %v2377 = vsel %vm2249, %v2233, %v1880
          %v2378 = vsel %vm2250, %v2234, %v1881
          %v2379 = vsel %vm2251, %v2235, %v1882
          %v2380 = vsel %vm2252, %v2236, %v1883
          %2381 = vst.msk [vmem:[#allocation3] sm:$0xff] %vm657, %v2365
          %2382 = vst.msk [vmem:[#allocation3 + $0x8] sm:$0xff] %vm657, %v2366
          %2383 = vst.msk [vmem:[#allocation3 + $0x10] sm:$0xff] %vm657, %v2367
          %2384 = vst.msk [vmem:[#allocation3 + $0x18] sm:$0xff] %vm657, %v2368
          %2385 = vst.msk [vmem:[#allocation3 + $0x20] sm:$0xff] %vm657, %v2369
          %2386 = vst.msk [vmem:[#allocation3 + $0x28] sm:$0xff] %vm657, %v2370
          %2387 = vst.msk [vmem:[#allocation3 + $0x30] sm:$0xff] %vm657, %v2371
          %2388 = vst.msk [vmem:[#allocation3 + $0x38] sm:$0xff] %vm657, %v2372
          %2389 = vst.msk [vmem:[#allocation3 + $0x40] sm:$0xff] %vm657, %v2373
          %2390 = vst.msk [vmem:[#allocation3 + $0x48] sm:$0xff] %vm657, %v2374
          %2391 = vst.msk [vmem:[#allocation3 + $0x50] sm:$0xff] %vm657, %v2375
          %2392 = vst.msk [vmem:[#allocation3 + $0x58] sm:$0xff] %vm657, %v2376
          %2393 = vst.msk [vmem:[#allocation3 + $0x60] sm:$0xff] %vm657, %v2377
          %2394 = vst.msk [vmem:[#allocation3 + $0x68] sm:$0xff] %vm657, %v2378
          %2395 = vst.msk [vmem:[#allocation3 + $0x70] sm:$0xff] %vm657, %v2379
          %2396 = vst.msk [vmem:[#allocation3 + $0x78] sm:$0xff] %vm657, %v2380
        $region40: #{tpu_custom_call.1} parent=27 // loop_footer
          %s1851 = sadd.s32 1, %s1847
        $region41: #{tpu_custom_call.1} parent=27 // loop_footer_branch
          %1846 = sbr.rel target = $region37
        $region42: #{tpu_custom_call.1} parent=27 // loop_exit
          _
        %v2397 = vld [vmem:[#allocation3] sm:$0xff]
        %v2398 = vld [vmem:[#allocation3 + $0x8] sm:$0xff]
        %v2399 = vld [vmem:[#allocation3 + $0x10] sm:$0xff]
        %v2400 = vld [vmem:[#allocation3 + $0x18] sm:$0xff]
        %v2401 = vld [vmem:[#allocation3 + $0x20] sm:$0xff]
        %v2402 = vld [vmem:[#allocation3 + $0x28] sm:$0xff]
        %v2403 = vld [vmem:[#allocation3 + $0x30] sm:$0xff]
        %v2404 = vld [vmem:[#allocation3 + $0x38] sm:$0xff]
        %v2405 = vld [vmem:[#allocation3 + $0x40] sm:$0xff]
        %v2406 = vld [vmem:[#allocation3 + $0x48] sm:$0xff]
        %v2407 = vld [vmem:[#allocation3 + $0x50] sm:$0xff]
        %v2408 = vld [vmem:[#allocation3 + $0x58] sm:$0xff]
        %v2409 = vld [vmem:[#allocation3 + $0x60] sm:$0xff]
        %v2410 = vld [vmem:[#allocation3 + $0x68] sm:$0xff]
        %v2411 = vld [vmem:[#allocation3 + $0x70] sm:$0xff]
        %v2412 = vld [vmem:[#allocation3 + $0x78] sm:$0xff]
        %2413 = vset.pattern.permute.xlu0 0
        %2414 = vperm.xlu0 %2413, %v2397
        %v2415 = vpop.permute.xlu0 %2414
        %2416 = vset.pattern.permute.xlu0 0
        %2417 = vperm.xlu0 %2416, %v2398
        %v2418 = vpop.permute.xlu0 %2417
        %2419 = vset.pattern.permute.xlu0 0
        %2420 = vperm.xlu0 %2419, %v2399
        %v2421 = vpop.permute.xlu0 %2420
        %2422 = vset.pattern.permute.xlu0 0
        %2423 = vperm.xlu0 %2422, %v2400
        %v2424 = vpop.permute.xlu0 %2423
        %2425 = vset.pattern.permute.xlu0 0
        %2426 = vperm.xlu0 %2425, %v2401
        %v2427 = vpop.permute.xlu0 %2426
        %2428 = vset.pattern.permute.xlu0 0
        %2429 = vperm.xlu0 %2428, %v2402
        %v2430 = vpop.permute.xlu0 %2429
        %2431 = vset.pattern.permute.xlu0 0
        %2432 = vperm.xlu0 %2431, %v2403
        %v2433 = vpop.permute.xlu0 %2432
        %2434 = vset.pattern.permute.xlu0 0
        %2435 = vperm.xlu0 %2434, %v2404
        %v2436 = vpop.permute.xlu0 %2435
        %2437 = vset.pattern.permute.xlu0 0
        %2438 = vperm.xlu0 %2437, %v2405
        %v2439 = vpop.permute.xlu0 %2438
        %2440 = vset.pattern.permute.xlu0 0
        %2441 = vperm.xlu0 %2440, %v2406
        %v2442 = vpop.permute.xlu0 %2441
        %2443 = vset.pattern.permute.xlu0 0
        %2444 = vperm.xlu0 %2443, %v2407
        %v2445 = vpop.permute.xlu0 %2444
        %2446 = vset.pattern.permute.xlu0 0
        %2447 = vperm.xlu0 %2446, %v2408
        %v2448 = vpop.permute.xlu0 %2447
        %2449 = vset.pattern.permute.xlu0 0
        %2450 = vperm.xlu0 %2449, %v2409
        %v2451 = vpop.permute.xlu0 %2450
        %2452 = vset.pattern.permute.xlu0 0
        %2453 = vperm.xlu0 %2452, %v2410
        %v2454 = vpop.permute.xlu0 %2453
        %2455 = vset.pattern.permute.xlu0 0
        %2456 = vperm.xlu0 %2455, %v2411
        %v2457 = vpop.permute.xlu0 %2456
        %2458 = vset.pattern.permute.xlu0 0
        %2459 = vperm.xlu0 %2458, %v2412
        %v2460 = vpop.permute.xlu0 %2459
        %vm2461 = vcmp.eq.s32.totalorder %v2415, %v227
        %vm2462 = vcmp.eq.s32.totalorder %v2418, %v227
        %vm2463 = vcmp.eq.s32.totalorder %v2421, %v227
        %vm2464 = vcmp.eq.s32.totalorder %v2424, %v227
        %vm2465 = vcmp.eq.s32.totalorder %v2427, %v227
        %vm2466 = vcmp.eq.s32.totalorder %v2430, %v227
        %vm2467 = vcmp.eq.s32.totalorder %v2433, %v227
        %vm2468 = vcmp.eq.s32.totalorder %v2436, %v227
        %vm2469 = vcmp.eq.s32.totalorder %v2439, %v227
        %vm2470 = vcmp.eq.s32.totalorder %v2442, %v227
        %vm2471 = vcmp.eq.s32.totalorder %v2445, %v227
        %vm2472 = vcmp.eq.s32.totalorder %v2448, %v227
        %vm2473 = vcmp.eq.s32.totalorder %v2451, %v227
        %vm2474 = vcmp.eq.s32.totalorder %v2454, %v227
        %vm2475 = vcmp.eq.s32.totalorder %v2457, %v227
        %vm2476 = vcmp.eq.s32.totalorder %v2460, %v227
        %v2477 = vsel %vm2461, %v210, 4294967295
        %v2478 = vsel %vm2462, %v211, 4294967295
        %v2479 = vsel %vm2463, %v212, 4294967295
        %v2480 = vsel %vm2464, %v213, 4294967295
        %v2481 = vsel %vm2465, %v214, 4294967295
        %v2482 = vsel %vm2466, %v215, 4294967295
        %v2483 = vsel %vm2467, %v216, 4294967295
        %v2484 = vsel %vm2468, %v217, 4294967295
        %v2485 = vsel %vm2469, %v218, 4294967295
        %v2486 = vsel %vm2470, %v219, 4294967295
        %v2487 = vsel %vm2471, %v220, 4294967295
        %v2488 = vsel %vm2472, %v221, 4294967295
        %v2489 = vsel %vm2473, %v222, 4294967295
        %v2490 = vsel %vm2474, %v223, 4294967295
        %v2491 = vsel %vm2475, %v224, 4294967295
        %v2492 = vsel %vm2476, %v225, 4294967295
        %vm2493 = vcmp.gt.s32.totalorder %v2477, %v2481
        %v2494 = vsel %vm2493, %v2477, %v2481
        %vm2495 = vcmp.gt.s32.totalorder %v2478, %v2482
        %v2496 = vsel %vm2495, %v2478, %v2482
        %vm2497 = vcmp.gt.s32.totalorder %v2479, %v2483
        %v2498 = vsel %vm2497, %v2479, %v2483
        %vm2499 = vcmp.gt.s32.totalorder %v2480, %v2484
        %v2500 = vsel %vm2499, %v2480, %v2484
        %vm2501 = vcmp.gt.s32.totalorder %v2494, %v2485
        %v2502 = vsel %vm2501, %v2494, %v2485
        %vm2503 = vcmp.gt.s32.totalorder %v2496, %v2486
        %v2504 = vsel %vm2503, %v2496, %v2486
        %vm2505 = vcmp.gt.s32.totalorder %v2498, %v2487
        %v2506 = vsel %vm2505, %v2498, %v2487
        %vm2507 = vcmp.gt.s32.totalorder %v2500, %v2488
        %v2508 = vsel %vm2507, %v2500, %v2488
        %vm2509 = vcmp.gt.s32.totalorder %v2502, %v2489
        %v2510 = vsel %vm2509, %v2502, %v2489
        %vm2511 = vcmp.gt.s32.totalorder %v2504, %v2490
        %v2512 = vsel %vm2511, %v2504, %v2490
        %vm2513 = vcmp.gt.s32.totalorder %v2506, %v2491
        %v2514 = vsel %vm2513, %v2506, %v2491
        %vm2515 = vcmp.gt.s32.totalorder %v2508, %v2492
        %v2516 = vsel %vm2515, %v2508, %v2492
        %vm2517 = vcmp.gt.s32.totalorder %v2510, %v2512
        %v2518 = vsel %vm2517, %v2510, %v2512
        %vm2519 = vcmp.gt.s32.totalorder %v2514, %v2516
        %v2520 = vsel %vm2519, %v2514, %v2516
        %vm2521 = vcmp.gt.s32.totalorder %v2518, %v2520
        %v2522 = vsel %vm2521, %v2518, %v2520
        %v2523 = vrot.slane %v2522, 4
        %vm2524 = vcmp.gt.s32.totalorder %v2522, %v2523
        %v2525 = vsel %vm2524, %v2522, %v2523
        %v2526 = vrot.slane %v2525, 2
        %vm2527 = vcmp.gt.s32.totalorder %v2525, %v2526
        %v2528 = vsel %vm2527, %v2525, %v2526
        %v2529 = vrot.slane %v2528, 1
        %vm2530 = vcmp.gt.s32.totalorder %v2528, %v2529
        %v2531 = vsel %vm2530, %v2528, %v2529
        %v2532 = vsel %vm2461, %v1750, 0.0
        %v2533 = vsel %vm2462, %v1751, 0.0
        %v2534 = vsel %vm2463, %v1752, 0.0
        %v2535 = vsel %vm2464, %v1753, 0.0
        %v2536 = vsel %vm2465, %v1754, 0.0
        %v2537 = vsel %vm2466, %v1755, 0.0
        %v2538 = vsel %vm2467, %v1756, 0.0
        %v2539 = vsel %vm2468, %v1757, 0.0
        %v2540 = vsel %vm2469, %v1758, 0.0
        %v2541 = vsel %vm2470, %v1759, 0.0
        %v2542 = vsel %vm2471, %v1760, 0.0
        %v2543 = vsel %vm2472, %v1761, 0.0
        %v2544 = vsel %vm2473, %v1762, 0.0
        %v2545 = vsel %vm2474, %v1763, 0.0
        %v2546 = vsel %vm2475, %v1764, 0.0
        %v2547 = vsel %vm2476, %v1765, 0.0
        %v2548 = vmax.f32 %v2532, %v2536
        %v2549 = vmax.f32 %v2533, %v2537
        %v2550 = vmax.f32 %v2534, %v2538
        %v2551 = vmax.f32 %v2535, %v2539
        %v2552 = vmax.f32 %v2548, %v2540
        %v2553 = vmax.f32 %v2549, %v2541
        %v2554 = vmax.f32 %v2550, %v2542
        %v2555 = vmax.f32 %v2551, %v2543
        %v2556 = vmax.f32 %v2552, %v2544
        %v2557 = vmax.f32 %v2553, %v2545
        %v2558 = vmax.f32 %v2554, %v2546
        %v2559 = vmax.f32 %v2555, %v2547
        %v2560 = vmax.f32 %v2556, %v2557
        %v2561 = vmax.f32 %v2558, %v2559
        %v2562 = vmax.f32 %v2560, %v2561
        %v2563 = vrot.slane %v2562, 4
        %v2564 = vmax.f32 %v2562, %v2563
        %v2565 = vrot.slane %v2564, 2
        %v2566 = vmax.f32 %v2564, %v2565
        %v2567 = vrot.slane %v2566, 1
        %v2568 = vmax.f32 %v2566, %v2567
        %s2569 = scalar_lea.vmem %s186, 1 [#allocation4]
        %2570 = vst [vmem:[%s2569] sm:$0x1] %v2568
        %s2571 = scalar_lea.vmem %s193, 1 [#allocation6]
        %2572 = vst [vmem:[%s2571] sm:$0x1] %v2531
        %s2573 = sand.u32 %s81, 1
        %s2574 = scalar_lea.sflag [#allocation5], %s2573
        %s2575 = sand.u32 %s81, 1
        %s2576 = smul.addr %s2575, 2
        %s2577 = scalar_lea.vmem [#allocation4], %s2576
        %s2578 = sand.u32 %s107, 1
        %s2579 = scalar_lea.sflag [#allocation7], %s2578
        %s2580 = sand.u32 %s107, 1
        %s2581 = smul.addr %s2580, 2
        %s2582 = scalar_lea.vmem [#allocation6], %s2581
        // Predicated region
        $region43: #{tpu_custom_call.1} parent=27 // pred_check
          %p2583 = pneg %p91
        $region44: #{tpu_custom_call.1} parent=27 // pred_check_branch
          %2585 = sbr.rel (%p2583) target = $region46
        $region45: #{tpu_custom_call.1} parent=27 // pred_region
          %s2586 = smul.u32 2, %s21
          %s2588 = ssub.s32 32, 32
          %2589 = vsyncadd %s2574, %s2588
          %s2590 = smul.addr %s2586, 16
          %s2591 = scalar_lea.hbm %s2, %s2590
          %s2592 = sshll.u32 %s2577, 4
          %s2593 = int_to_ptr.vmem [resolvable:$true] %s2592
          %2598 = dma.vmem_to_hbm [thread:$0]  %s2593, 32, %s2591, %s2574, 16, 16, 1
        $region46: #{tpu_custom_call.1} parent=27 // pred_fallthru
          _
        // Predicated region
        $region47: #{tpu_custom_call.1} parent=27 // pred_check
          %p2599 = pneg %p117
        $region48: #{tpu_custom_call.1} parent=27 // pred_check_branch
          %2601 = sbr.rel (%p2599) target = $region50
        $region49: #{tpu_custom_call.1} parent=27 // pred_region
          %s2602 = smul.u32 2, %s21
          %s2604 = ssub.s32 32, 32
          %2605 = vsyncadd %s2579, %s2604
          %s2606 = smul.addr %s2602, 16
          %s2607 = scalar_lea.hbm %s3, %s2606
          %s2608 = sshll.u32 %s2582, 4
          %s2609 = int_to_ptr.vmem [resolvable:$true] %s2608
          %2614 = dma.vmem_to_hbm [thread:$0]  %s2609, 32, %s2607, %s2579, 16, 16, 1
        $region50: #{tpu_custom_call.1} parent=27 // pred_fallthru
          _
      $region28: #{tpu_custom_call.1} parent=5 // pred_fallthru
        _
      %p2615 = scmp.le.s32.totalorder 2, %s16
      // Predicated region
      $region51: #{tpu_custom_call.1} parent=5 // pred_check
        %p2616 = pneg %p2615
      $region52: #{tpu_custom_call.1} parent=5 // pred_check_branch
        %2618 = sbr.rel (%p2616) target = $region54
      $region53: #{tpu_custom_call.1} parent=5 // pred_region
        %s2619 = ssub.s32 %s16, 2
        // Predicated region
        $region55: #{tpu_custom_call.1} parent=53 // pred_check
          %p2620 = pneg %p97
        $region56: #{tpu_custom_call.1} parent=53 // pred_check_branch
          %2622 = sbr.rel (%p2620) target = $region58
        $region57: #{tpu_custom_call.1} parent=53 // pred_region
          %s2623 = sand.u32 %s82, 1
          %s2624 = scalar_lea.sflag [#allocation5], %s2623
          %s2625 = sand.u32 %s82, 1
          %s2626 = smul.addr %s2625, 2
          %s2627 = scalar_lea.vmem [#allocation4], %s2626
          %2628 = dma.done %s2624, 32
        $region58: #{tpu_custom_call.1} parent=53 // pred_fallthru
          _
        // Predicated region
        $region59: #{tpu_custom_call.1} parent=53 // pred_check
          %p2629 = pneg %p123
        $region60: #{tpu_custom_call.1} parent=53 // pred_check_branch
          %2631 = sbr.rel (%p2629) target = $region62
        $region61: #{tpu_custom_call.1} parent=53 // pred_region
          %s2632 = sand.u32 %s108, 1
          %s2633 = scalar_lea.sflag [#allocation7], %s2632
          %s2634 = sand.u32 %s108, 1
          %s2635 = smul.addr %s2634, 2
          %s2636 = scalar_lea.vmem [#allocation6], %s2635
          %2637 = dma.done %s2633, 32
        $region62: #{tpu_custom_call.1} parent=53 // pred_fallthru
          _
      $region54: #{tpu_custom_call.1} parent=5 // pred_fallthru
        _
    $region6: #{tpu_custom_call.1} parent=1 // loop_footer
      %s20 = sadd.s32 1, %s16
    $region7: #{tpu_custom_call.1} parent=1 // loop_footer_branch
      %15 = sbr.rel target = $region3
    $region8: #{tpu_custom_call.1} parent=1 // loop_exit
      _
    %2638 = vsyncpa [#allocation5], 1
    %s2639 = scalar_lea.sflag [#allocation5], 1
    %2640 = vsyncpa %s2639, 1
    %2641 = vsyncpa [#allocation7], 1
    %s2642 = scalar_lea.sflag [#allocation7], 1
    %2643 = vsyncpa %s2642, 1

</llo_original>
